<compile_context>
chip_gen: v7x
topology: tpu7x:2x2x1
jax: 0.10.0
libtpu: 0.0.40
codegen_flags: <defaults>
</compile_context>

<pallas_src>
import functools
import math

import jax
import jax.numpy as jnp
import numpy as np
from jax.experimental import pallas as pl
from jax.experimental.pallas import tpu as pltpu


def _layer_norm(v, gamma, beta, eps):
    mu = jnp.mean(v, axis=-1, keepdims=True)
    var = jnp.mean(jnp.square(v - mu), axis=-1, keepdims=True)
    return (v - mu) * jax.lax.rsqrt(var + eps) * gamma + beta


# ----------------------------------------------------------------------------
# Pallas kernel: one grid step == (one batch element, one transformer Block)
# ----------------------------------------------------------------------------
def _transformer_block_kernel(
    x_ref, maskadd_ref, pe_ref,
    wqkv_ref, bqkv_ref, g1_ref, b1_ref, wm_ref, bm_ref, g2_ref, b2_ref,
    out_ref, *, num_heads):
    seq = x_ref.shape[1]
    dim = x_ref.shape[2]
    head_w = dim // num_heads
    inv_sqrt_w = 1.0 / math.sqrt(head_w)
    eps = 1e-5                                    # torch.nn.LayerNorm default
    cdt = wqkv_ref.dtype                          # MXU compute dtype (bf16)

    layer = pl.program_id(1)

    # First layer: seed the VMEM-resident accumulator (= output block) with x.
    @pl.when(layer == 0)
    def _():
        out_ref[...] = x_ref[...]

    xb = out_ref[0] + pe_ref[0]                   # (S, D) f32   "x = x + pe"

    # Fused Q|K|V projection: one bf16 MXU matmul, f32 accumulation + f32 bias.
    qkv = jnp.dot(xb.astype(cdt), wqkv_ref[...],
                  preferred_element_type=jnp.float32) + bqkv_ref[...]  # (S, 3D)
    qkv_c = qkv.astype(cdt)                       # single bf16 cast, sliced per head

    # Hoisted additive mask (JAX does not CSE broadcast_in_dim).
    madd = jnp.broadcast_to(maskadd_ref[0], (seq, seq))                # (S, S)

    # Per-head scaled dot-product attention (small static H -> unrolled).
    heads = []
    for h in range(num_heads):
        q_h = qkv_c[:, h * head_w:(h + 1) * head_w]
        k_h = qkv_c[:, dim + h * head_w:dim + (h + 1) * head_w]
        v_h = qkv_c[:, 2 * dim + h * head_w:2 * dim + (h + 1) * head_w]
        s = jnp.dot(q_h, k_h.T, preferred_element_type=jnp.float32)   # (S, S)
        s = s * inv_sqrt_w + madd
        s = s - jnp.max(s, axis=-1, keepdims=True)          # stable softmax
        e = jnp.exp(s)
        # EUP reciprocal instead of a VPU divide.  approx=False keeps numerics
        # tight; flip to approx=True after verifying tolerance on hardware.
        p = e * pl.reciprocal(jnp.sum(e, axis=-1, keepdims=True), approx=False)
        heads.append(jnp.dot(p.astype(cdt), v_h,
                             preferred_element_type=jnp.float32))
    hcat = jnp.concatenate(heads, axis=-1)                   # (S, D)

    # attn_norm + residual.
    attn_x = _layer_norm(hcat, g1_ref[...], b1_ref[...], eps) + xb

    # MLP (single Linear, bf16 MXU) + mlp_norm + residual. Dropout = identity.
    mlp = jnp.dot(attn_x.astype(cdt), wm_ref[...],
                  preferred_element_type=jnp.float32) + bm_ref[...]
    out_ref[0] = _layer_norm(mlp, g2_ref[...], b2_ref[...], eps) + attn_x


# ----------------------------------------------------------------------------
# Wrapper
# ----------------------------------------------------------------------------
def simple_transformer(x, mask, pe, params, *, num_heads,
                       mxu_dtype=jnp.bfloat16):
    B, S, D = x.shape
    L = params["wq"].shape[0]
    assert D % num_heads == 0

    # Precomputed additive attention mask: (B, 1, S), -1e4 where masked.
    mask_add = (-10000.0 * (1.0 - mask.astype(jnp.float32))).reshape(B, 1, S)

    # Pack per-layer weights: fuse Q|K|V; matmul weights in bf16 for the MXU.
    wqkv = jnp.concatenate([params["wq"], params["wk"], params["wv"]],
                           axis=-1).astype(mxu_dtype)        # (L, D, 3D)
    bqkv = jnp.concatenate([params["bq"], params["bk"], params["bv"]],
                           axis=-1).astype(jnp.float32)      # (L, 1, 3D)
    wm = params["wm"].astype(mxu_dtype)                      # (L, D, D)

    kernel = functools.partial(_transformer_block_kernel, num_heads=num_heads)

    act_spec = pl.BlockSpec((1, S, D), lambda b, l: (b, 0, 0))
    mat_spec = lambda n: pl.BlockSpec((None, D, n), lambda b, l: (l, 0, 0))
    vec_spec = lambda n: pl.BlockSpec((None, 1, n), lambda b, l: (l, 0, 0))

    grid_spec = pltpu.PrefetchScalarGridSpec(
        num_scalar_prefetch=0,
        grid=(B, L),                          # serial layer axis last (inner)
        in_specs=[
            act_spec,                                           # x
            pl.BlockSpec((1, 1, S), lambda b, l: (b, 0, 0)),    # additive mask
            act_spec,                                           # pe
            mat_spec(3 * D), vec_spec(3 * D),                   # fused QKV W, b
            vec_spec(D), vec_spec(D),                           # attn_norm g, b
            mat_spec(D), vec_spec(D),                           # mlp W, b
            vec_spec(D), vec_spec(D),                           # mlp_norm g, b
        ],
        # Constant block index along the layer axis => this block is the
        # VMEM-resident activation accumulator across the whole layer sweep.
        out_specs=act_spec,
    )

    return pl.pallas_call(
        kernel,
        out_shape=jax.ShapeDtypeStruct((B, S, D), jnp.float32),
        grid_spec=grid_spec,
        compiler_params=pltpu.CompilerParams(
            dimension_semantics=("parallel", "arbitrary"),
            vmem_limit_bytes=32 * 1024 * 1024),
    )(x, mask_add, pe,
      wqkv, bqkv, params["g1"], params["b1"], wm, params["bm"],
      params["g2"], params["b2"])


# ----------------------------------------------------------------------------
# Deterministic parameter init (mirrors init_weights: xavier-uniform Linear
# weights, normal(std=1e-6) biases, LayerNorm = (1, 0)).
# ----------------------------------------------------------------------------
def init_params(key, num_layers, dim):
    bound = math.sqrt(6.0 / (dim + dim))      # xavier_uniform, square Linear
    keys = jax.random.split(key, num_layers * 8)

    def lin_w(k):
        return jax.random.uniform(k, (dim, dim), jnp.float32, -bound, bound)

    def lin_b(k):
        return jax.random.normal(k, (1, dim), jnp.float32) * 1e-6

    wq, bq, wk, bk, wv, bv, wm, bm = ([] for _ in range(8))
    for l in range(num_layers):
        base = l * 8
        wq.append(lin_w(keys[base + 0])); bq.append(lin_b(keys[base + 1]))
        wk.append(lin_w(keys[base + 2])); bk.append(lin_b(keys[base + 3]))
        wv.append(lin_w(keys[base + 4])); bv.append(lin_b(keys[base + 5]))
        wm.append(lin_w(keys[base + 6])); bm.append(lin_b(keys[base + 7]))

    ones = jnp.ones((num_layers, 1, dim), jnp.float32)
    zeros = jnp.zeros((num_layers, 1, dim), jnp.float32)
    # TODO(synk): `weight_fc` from SimpleTransformer.__init__ is unused in the
    # merge_token=False forward path, so it is not materialized here.
    return {
        "wq": jnp.stack(wq), "bq": jnp.stack(bq),
        "wk": jnp.stack(wk), "bk": jnp.stack(bk),
        "wv": jnp.stack(wv), "bv": jnp.stack(bv),
        "wm": jnp.stack(wm), "bm": jnp.stack(bm),
        "g1": ones, "b1": zeros,
        "g2": ones, "b2": zeros,
    }


# ----------------------------------------------------------------------------
# Pure-JAX reference (mirrors the kernel's bf16-operand / f32-accumulate MXU
# precision so the comparison isolates kernel bugs, not precision policy).
# ----------------------------------------------------------------------------
def ref_forward(x, mask, pe, params, num_heads, mxu_dtype=jnp.bfloat16):
    B, S, D = x.shape
    L = params["wq"].shape[0]
    W = D // num_heads
    eps = 1e-5

    def ln(v, g, b):
        mu = jnp.mean(v, -1, keepdims=True)
        var = jnp.mean(jnp.square(v - mu), -1, keepdims=True)
        return (v - mu) * jax.lax.rsqrt(var + eps) * g + b

    def mm(a, w):
        return jnp.dot(a.astype(mxu_dtype), w.astype(mxu_dtype),
                       preferred_element_type=jnp.float32)

    for l in range(L):
        x = x + pe
        q = mm(x, params["wq"][l]) + params["bq"][l]
        k = mm(x, params["wk"][l]) + params["bk"][l]
        v = mm(x, params["wv"][l]) + params["bv"][l]
        q = q.reshape(B, S, num_heads, W).transpose(0, 2, 1, 3).astype(mxu_dtype)
        k = k.reshape(B, S, num_heads, W).transpose(0, 2, 1, 3).astype(mxu_dtype)
        v = v.reshape(B, S, num_heads, W).transpose(0, 2, 1, 3).astype(mxu_dtype)
        s = jnp.einsum("bhqw,bhkw->bhqk", q, k,
                       preferred_element_type=jnp.float32) / np.sqrt(W)
        s = s - 10000.0 * (1.0 - mask[:, None, None, :])
        p = jax.nn.softmax(s, axis=-1)
        h = jnp.einsum("bhqk,bhkw->bhqw", p.astype(mxu_dtype), v,
                       preferred_element_type=jnp.float32)
        h = h.transpose(0, 2, 1, 3).reshape(B, S, D)
        attn_x = ln(h, params["g1"][l], params["b1"][l]) + x
        mlp = mm(attn_x, params["wm"][l]) + params["bm"][l]
        x = ln(mlp, params["g2"][l], params["b2"][l]) + attn_x
    return x


if __name__ == "__main__":
    B, S, D, H, L = 2, 8, 32, 4, 2          # batch, seq, dim, heads, num_attn

    key = jax.random.PRNGKey(0)
    k_x, k_pe, k_p = jax.random.split(key, 3)
    x = jax.random.normal(k_x, (B, S, D), jnp.float32)
    pe = jax.random.normal(k_pe, (B, S, D), jnp.float32) * 0.1
    # mask: batch 0 fully valid, batch 1 has the last two positions masked out.
    mask = jnp.stack([jnp.ones((S,), jnp.float32),
                      (jnp.arange(S) < S - 2).astype(jnp.float32)], axis=0)

    params = init_params(k_p, L, D)

    out = simple_transformer(x, mask, pe, params, num_heads=H)
    jax.block_until_ready(out)

    ref = ref_forward(x, mask, pe, params, H)
    np.testing.assert_allclose(np.asarray(out), np.asarray(ref),
                               rtol=5e-3, atol=5e-3)

    print("KERNEL_OK")
</pallas_src>

<mosaic_0001>
module attributes {stable_mosaic.version = 11 : i64} {
  func.func @_transformer_block_kernel(%arg0: i32, %arg1: i32, %arg2: memref<1x8x32xf32, #tpu.memory_space<vmem>>, %arg3: memref<1x1x8xf32, #tpu.memory_space<vmem>>, %arg4: memref<1x8x32xf32, #tpu.memory_space<vmem>>, %arg5: memref<1x32x96xbf16, #tpu.memory_space<vmem>>, %arg6: memref<1x1x96xf32, #tpu.memory_space<vmem>>, %arg7: memref<1x1x32xf32, #tpu.memory_space<vmem>>, %arg8: memref<1x1x32xf32, #tpu.memory_space<vmem>>, %arg9: memref<1x32x32xbf16, #tpu.memory_space<vmem>>, %arg10: memref<1x1x32xf32, #tpu.memory_space<vmem>>, %arg11: memref<1x1x32xf32, #tpu.memory_space<vmem>>, %arg12: memref<1x1x32xf32, #tpu.memory_space<vmem>>, %arg13: memref<1x8x32xf32, #tpu.memory_space<vmem>>) attributes {dimension_semantics = [#tpu.dimension_semantics<parallel>, #tpu.dimension_semantics<arbitrary>], iteration_bounds = array<i64: 2, 2>, scalar_prefetch = 0 : i64, scratch_operands = 0 : i64, tpu.core_type = #tpu.core_type<tc>, window_params = [{transform_indices = @transform_0, window_bounds = array<i64: 1, 8, 32>}, {transform_indices = @transform_1, window_bounds = array<i64: 1, 1, 8>}, {transform_indices = @transform_2, window_bounds = array<i64: 1, 8, 32>}, {transform_indices = @transform_3, window_bounds = array<i64: 1, 32, 96>}, {transform_indices = @transform_4, window_bounds = array<i64: 1, 1, 96>}, {transform_indices = @transform_5, window_bounds = array<i64: 1, 1, 32>}, {transform_indices = @transform_6, window_bounds = array<i64: 1, 1, 32>}, {transform_indices = @transform_7, window_bounds = array<i64: 1, 32, 32>}, {transform_indices = @transform_8, window_bounds = array<i64: 1, 1, 32>}, {transform_indices = @transform_9, window_bounds = array<i64: 1, 1, 32>}, {transform_indices = @transform_10, window_bounds = array<i64: 1, 1, 32>}, {transform_indices = @transform_11, window_bounds = array<i64: 1, 8, 32>}]} {
    %c0_i32 = arith.constant 0 : i32
    %0 = arith.cmpi eq, %arg1, %c0_i32 : i32
    %1 = arith.extui %0 : i1 to i32
    %c0_i32_0 = arith.constant 0 : i32
    %2 = arith.cmpi ne, %1, %c0_i32_0 : i32
    scf.if %2 {
      %c0_67 = arith.constant 0 : index
      %c0_68 = arith.constant 0 : index
      %c0_69 = arith.constant 0 : index
      %167 = vector.load %arg2[%c0_67, %c0_68, %c0_69] : memref<1x8x32xf32, #tpu.memory_space<vmem>>, vector<1x8x32xf32>
      %c0_70 = arith.constant 0 : index
      %c0_71 = arith.constant 0 : index
      %c0_72 = arith.constant 0 : index
      %168 = vector.load %arg13[%c0_70, %c0_71, %c0_72] : memref<1x8x32xf32, #tpu.memory_space<vmem>>, vector<1x8x32xf32>
      tpu.vector_store %arg13[%c0_70, %c0_71, %c0_72], %167 {strides = array<i32>} : memref<1x8x32xf32, #tpu.memory_space<vmem>>, vector<1x8x32xf32>,
    } else {
    }
    %c0 = arith.constant 0 : index
    %c0_1 = arith.constant 0 : index
    %c0_2 = arith.constant 0 : index
    %3 = vector.load %arg13[%c0, %c0_1, %c0_2] : memref<1x8x32xf32, #tpu.memory_space<vmem>>, vector<1x8x32xf32>
    %4 = vector.shape_cast %3 : vector<1x8x32xf32> to vector<8x32xf32>
    %c0_3 = arith.constant 0 : index
    %c0_4 = arith.constant 0 : index
    %c0_5 = arith.constant 0 : index
    %5 = vector.load %arg4[%c0_3, %c0_4, %c0_5] : memref<1x8x32xf32, #tpu.memory_space<vmem>>, vector<1x8x32xf32>
    %6 = vector.shape_cast %5 : vector<1x8x32xf32> to vector<8x32xf32>
    %7 = arith.addf %4, %6 : vector<8x32xf32>
    %8 = arith.truncf %7 : vector<8x32xf32> to vector<8x32xbf16>
    %c0_6 = arith.constant 0 : index
    %c0_7 = arith.constant 0 : index
    %c0_8 = arith.constant 0 : index
    %9 = vector.load %arg5[%c0_6, %c0_7, %c0_8] : memref<1x32x96xbf16, #tpu.memory_space<vmem>>, vector<1x32x96xbf16>
    %10 = vector.shape_cast %9 : vector<1x32x96xbf16> to vector<32x96xbf16>
    %cst = arith.constant dense<0.000000e+00> : vector<8x96xf32>
    %11 = tpu.matmul %8, %10, %cst {dimension_numbers = #tpu.dot_dimension_numbers<[1], [0], [0], [1], [0, 0, 1, 1], [], []>} : vector<8x32xbf16>, vector<32x96xbf16>, vector<8x96xf32> -> vector<8x96xf32>
    %c0_9 = arith.constant 0 : index
    %c0_10 = arith.constant 0 : index
    %c0_11 = arith.constant 0 : index
    %12 = vector.load %arg6[%c0_9, %c0_10, %c0_11] : memref<1x1x96xf32, #tpu.memory_space<vmem>>, vector<1x1x96xf32>
    %13 = vector.shape_cast %12 : vector<1x1x96xf32> to vector<1x96xf32>
    %14 = vector.broadcast %13 : vector<1x96xf32> to vector<8x96xf32>
    %15 = arith.addf %11, %14 : vector<8x96xf32>
    %16 = arith.truncf %15 : vector<8x96xf32> to vector<8x96xbf16>
    %c0_12 = arith.constant 0 : index
    %c0_13 = arith.constant 0 : index
    %c0_14 = arith.constant 0 : index
    %17 = vector.load %arg3[%c0_12, %c0_13, %c0_14] : memref<1x1x8xf32, #tpu.memory_space<vmem>>, vector<1x1x8xf32>
    %18 = vector.shape_cast %17 : vector<1x1x8xf32> to vector<1x8xf32>
    %19 = vector.shape_cast %18 : vector<1x8xf32> to vector<1x8xf32>
    %20 = vector.broadcast %19 : vector<1x8xf32> to vector<8x8xf32>
    %21 = vector.extract_strided_slice %16 {offsets = [0, 0], sizes = [8, 8], strides = [1, 1]} : vector<8x96xbf16> to vector<8x8xbf16>
    %22 = vector.extract_strided_slice %16 {offsets = [0, 32], sizes = [8, 8], strides = [1, 1]} : vector<8x96xbf16> to vector<8x8xbf16>
    %23 = vector.extract_strided_slice %16 {offsets = [0, 64], sizes = [8, 8], strides = [1, 1]} : vector<8x96xbf16> to vector<8x8xbf16>
    %24 = tpu.transpose %22, [1, 0] : vector<8x8xbf16> -> vector<8x8xbf16>
    %cst_15 = arith.constant dense<0.000000e+00> : vector<8x8xf32>
    %25 = tpu.matmul %21, %24, %cst_15 {dimension_numbers = #tpu.dot_dimension_numbers<[1], [0], [0], [1], [0, 0, 1, 1], [], []>} : vector<8x8xbf16>, vector<8x8xbf16>, vector<8x8xf32> -> vector<8x8xf32>
    %cst_16 = arith.constant 0.353553385 : f32
    %26 = vector.broadcast %cst_16 : f32 to vector<8x8xf32>
    %27 = arith.mulf %25, %26 : vector<8x8xf32>
    %28 = arith.addf %27, %20 : vector<8x8xf32>
    %cst_17 = arith.constant dense<0xFF800000> : vector<8xf32>
    %29 = vector.multi_reduction <maximumf>, %28, %cst_17 [1] : vector<8x8xf32> to vector<8xf32>
    %30 = vector.shape_cast %29 : vector<8xf32> to vector<8x1xf32>
    %31 = vector.broadcast %30 : vector<8x1xf32> to vector<8x8xf32>
    %32 = arith.subf %28, %31 : vector<8x8xf32>
    %33 = math.exp %32 : vector<8x8xf32>
    %cst_18 = arith.constant dense<0.000000e+00> : vector<8xf32>
    %34 = vector.multi_reduction <add>, %33, %cst_18 [1] : vector<8x8xf32> to vector<8xf32>
    %35 = vector.shape_cast %34 : vector<8xf32> to vector<8x1xf32>
    %36 = tpu.reciprocal %35 : vector<8x1xf32> -> vector<8x1xf32>
    %37 = vector.broadcast %36 : vector<8x1xf32> to vector<8x8xf32>
    %38 = arith.mulf %33, %37 : vector<8x8xf32>
    %39 = arith.truncf %38 : vector<8x8xf32> to vector<8x8xbf16>
    %cst_19 = arith.constant dense<0.000000e+00> : vector<8x8xf32>
    %40 = tpu.matmul %39, %23, %cst_19 {dimension_numbers = #tpu.dot_dimension_numbers<[1], [0], [0], [1], [0, 0, 1, 1], [], []>} : vector<8x8xbf16>, vector<8x8xbf16>, vector<8x8xf32> -> vector<8x8xf32>
    %41 = vector.extract_strided_slice %16 {offsets = [0, 8], sizes = [8, 8], strides = [1, 1]} : vector<8x96xbf16> to vector<8x8xbf16>
    %42 = vector.extract_strided_slice %16 {offsets = [0, 40], sizes = [8, 8], strides = [1, 1]} : vector<8x96xbf16> to vector<8x8xbf16>
    %43 = vector.extract_strided_slice %16 {offsets = [0, 72], sizes = [8, 8], strides = [1, 1]} : vector<8x96xbf16> to vector<8x8xbf16>
    %44 = tpu.transpose %42, [1, 0] : vector<8x8xbf16> -> vector<8x8xbf16>
    %cst_20 = arith.constant dense<0.000000e+00> : vector<8x8xf32>
    %45 = tpu.matmul %41, %44, %cst_20 {dimension_numbers = #tpu.dot_dimension_numbers<[1], [0], [0], [1], [0, 0, 1, 1], [], []>} : vector<8x8xbf16>, vector<8x8xbf16>, vector<8x8xf32> -> vector<8x8xf32>
    %cst_21 = arith.constant 0.353553385 : f32
    %46 = vector.broadcast %cst_21 : f32 to vector<8x8xf32>
    %47 = arith.mulf %45, %46 : vector<8x8xf32>
    %48 = arith.addf %47, %20 : vector<8x8xf32>
    %cst_22 = arith.constant dense<0xFF800000> : vector<8xf32>
    %49 = vector.multi_reduction <maximumf>, %48, %cst_22 [1] : vector<8x8xf32> to vector<8xf32>
    %50 = vector.shape_cast %49 : vector<8xf32> to vector<8x1xf32>
    %51 = vector.broadcast %50 : vector<8x1xf32> to vector<8x8xf32>
    %52 = arith.subf %48, %51 : vector<8x8xf32>
    %53 = math.exp %52 : vector<8x8xf32>
    %cst_23 = arith.constant dense<0.000000e+00> : vector<8xf32>
    %54 = vector.multi_reduction <add>, %53, %cst_23 [1] : vector<8x8xf32> to vector<8xf32>
    %55 = vector.shape_cast %54 : vector<8xf32> to vector<8x1xf32>
    %56 = tpu.reciprocal %55 : vector<8x1xf32> -> vector<8x1xf32>
    %57 = vector.broadcast %56 : vector<8x1xf32> to vector<8x8xf32>
    %58 = arith.mulf %53, %57 : vector<8x8xf32>
    %59 = arith.truncf %58 : vector<8x8xf32> to vector<8x8xbf16>
    %cst_24 = arith.constant dense<0.000000e+00> : vector<8x8xf32>
    %60 = tpu.matmul %59, %43, %cst_24 {dimension_numbers = #tpu.dot_dimension_numbers<[1], [0], [0], [1], [0, 0, 1, 1], [], []>} : vector<8x8xbf16>, vector<8x8xbf16>, vector<8x8xf32> -> vector<8x8xf32>
    %61 = vector.extract_strided_slice %16 {offsets = [0, 16], sizes = [8, 8], strides = [1, 1]} : vector<8x96xbf16> to vector<8x8xbf16>
    %62 = vector.extract_strided_slice %16 {offsets = [0, 48], sizes = [8, 8], strides = [1, 1]} : vector<8x96xbf16> to vector<8x8xbf16>
    %63 = vector.extract_strided_slice %16 {offsets = [0, 80], sizes = [8, 8], strides = [1, 1]} : vector<8x96xbf16> to vector<8x8xbf16>
    %64 = tpu.transpose %62, [1, 0] : vector<8x8xbf16> -> vector<8x8xbf16>
    %cst_25 = arith.constant dense<0.000000e+00> : vector<8x8xf32>
    %65 = tpu.matmul %61, %64, %cst_25 {dimension_numbers = #tpu.dot_dimension_numbers<[1], [0], [0], [1], [0, 0, 1, 1], [], []>} : vector<8x8xbf16>, vector<8x8xbf16>, vector<8x8xf32> -> vector<8x8xf32>
    %cst_26 = arith.constant 0.353553385 : f32
    %66 = vector.broadcast %cst_26 : f32 to vector<8x8xf32>
    %67 = arith.mulf %65, %66 : vector<8x8xf32>
    %68 = arith.addf %67, %20 : vector<8x8xf32>
    %cst_27 = arith.constant dense<0xFF800000> : vector<8xf32>
    %69 = vector.multi_reduction <maximumf>, %68, %cst_27 [1] : vector<8x8xf32> to vector<8xf32>
    %70 = vector.shape_cast %69 : vector<8xf32> to vector<8x1xf32>
    %71 = vector.broadcast %70 : vector<8x1xf32> to vector<8x8xf32>
    %72 = arith.subf %68, %71 : vector<8x8xf32>
    %73 = math.exp %72 : vector<8x8xf32>
    %cst_28 = arith.constant dense<0.000000e+00> : vector<8xf32>
    %74 = vector.multi_reduction <add>, %73, %cst_28 [1] : vector<8x8xf32> to vector<8xf32>
    %75 = vector.shape_cast %74 : vector<8xf32> to vector<8x1xf32>
    %76 = tpu.reciprocal %75 : vector<8x1xf32> -> vector<8x1xf32>
    %77 = vector.broadcast %76 : vector<8x1xf32> to vector<8x8xf32>
    %78 = arith.mulf %73, %77 : vector<8x8xf32>
    %79 = arith.truncf %78 : vector<8x8xf32> to vector<8x8xbf16>
    %cst_29 = arith.constant dense<0.000000e+00> : vector<8x8xf32>
    %80 = tpu.matmul %79, %63, %cst_29 {dimension_numbers = #tpu.dot_dimension_numbers<[1], [0], [0], [1], [0, 0, 1, 1], [], []>} : vector<8x8xbf16>, vector<8x8xbf16>, vector<8x8xf32> -> vector<8x8xf32>
    %81 = vector.extract_strided_slice %16 {offsets = [0, 24], sizes = [8, 8], strides = [1, 1]} : vector<8x96xbf16> to vector<8x8xbf16>
    %82 = vector.extract_strided_slice %16 {offsets = [0, 56], sizes = [8, 8], strides = [1, 1]} : vector<8x96xbf16> to vector<8x8xbf16>
    %83 = vector.extract_strided_slice %16 {offsets = [0, 88], sizes = [8, 8], strides = [1, 1]} : vector<8x96xbf16> to vector<8x8xbf16>
    %84 = tpu.transpose %82, [1, 0] : vector<8x8xbf16> -> vector<8x8xbf16>
    %cst_30 = arith.constant dense<0.000000e+00> : vector<8x8xf32>
    %85 = tpu.matmul %81, %84, %cst_30 {dimension_numbers = #tpu.dot_dimension_numbers<[1], [0], [0], [1], [0, 0, 1, 1], [], []>} : vector<8x8xbf16>, vector<8x8xbf16>, vector<8x8xf32> -> vector<8x8xf32>
    %cst_31 = arith.constant 0.353553385 : f32
    %86 = vector.broadcast %cst_31 : f32 to vector<8x8xf32>
    %87 = arith.mulf %85, %86 : vector<8x8xf32>
    %88 = arith.addf %87, %20 : vector<8x8xf32>
    %cst_32 = arith.constant dense<0xFF800000> : vector<8xf32>
    %89 = vector.multi_reduction <maximumf>, %88, %cst_32 [1] : vector<8x8xf32> to vector<8xf32>
    %90 = vector.shape_cast %89 : vector<8xf32> to vector<8x1xf32>
    %91 = vector.broadcast %90 : vector<8x1xf32> to vector<8x8xf32>
    %92 = arith.subf %88, %91 : vector<8x8xf32>
    %93 = math.exp %92 : vector<8x8xf32>
    %cst_33 = arith.constant dense<0.000000e+00> : vector<8xf32>
    %94 = vector.multi_reduction <add>, %93, %cst_33 [1] : vector<8x8xf32> to vector<8xf32>
    %95 = vector.shape_cast %94 : vector<8xf32> to vector<8x1xf32>
    %96 = tpu.reciprocal %95 : vector<8x1xf32> -> vector<8x1xf32>
    %97 = vector.broadcast %96 : vector<8x1xf32> to vector<8x8xf32>
    %98 = arith.mulf %93, %97 : vector<8x8xf32>
    %99 = arith.truncf %98 : vector<8x8xf32> to vector<8x8xbf16>
    %cst_34 = arith.constant dense<0.000000e+00> : vector<8x8xf32>
    %100 = tpu.matmul %99, %83, %cst_34 {dimension_numbers = #tpu.dot_dimension_numbers<[1], [0], [0], [1], [0, 0, 1, 1], [], []>} : vector<8x8xbf16>, vector<8x8xbf16>, vector<8x8xf32> -> vector<8x8xf32>
    %101 = tpu.concatenate %40, %60, %80, %100 in 1 : vector<8x8xf32>, vector<8x8xf32>, vector<8x8xf32>, vector<8x8xf32> -> vector<8x32xf32>
    %c0_35 = arith.constant 0 : index
    %c0_36 = arith.constant 0 : index
    %c0_37 = arith.constant 0 : index
    %102 = vector.load %arg7[%c0_35, %c0_36, %c0_37] : memref<1x1x32xf32, #tpu.memory_space<vmem>>, vector<1x1x32xf32>
    %103 = vector.shape_cast %102 : vector<1x1x32xf32> to vector<1x32xf32>
    %c0_38 = arith.constant 0 : index
    %c0_39 = arith.constant 0 : index
    %c0_40 = arith.constant 0 : index
    %104 = vector.load %arg8[%c0_38, %c0_39, %c0_40] : memref<1x1x32xf32, #tpu.memory_space<vmem>>, vector<1x1x32xf32>
    %105 = vector.shape_cast %104 : vector<1x1x32xf32> to vector<1x32xf32>
    %cst_41 = arith.constant dense<0.000000e+00> : vector<8xf32>
    %106 = vector.multi_reduction <add>, %101, %cst_41 [1] : vector<8x32xf32> to vector<8xf32>
    %107 = vector.shape_cast %106 : vector<8xf32> to vector<8x1xf32>
    %cst_42 = arith.constant 3.200000e+01 : f32
    %108 = vector.broadcast %cst_42 : f32 to vector<8x1xf32>
    %109 = arith.divf %107, %108 : vector<8x1xf32>
    %110 = vector.broadcast %109 : vector<8x1xf32> to vector<8x32xf32>
    %111 = arith.subf %101, %110 : vector<8x32xf32>
    %112 = arith.mulf %111, %111 : vector<8x32xf32>
    %cst_43 = arith.constant dense<0.000000e+00> : vector<8xf32>
    %113 = vector.multi_reduction <add>, %112, %cst_43 [1] : vector<8x32xf32> to vector<8xf32>
    %114 = vector.shape_cast %113 : vector<8xf32> to vector<8x1xf32>
    %cst_44 = arith.constant 3.200000e+01 : f32
    %115 = vector.broadcast %cst_44 : f32 to vector<8x1xf32>
    %116 = arith.divf %114, %115 : vector<8x1xf32>
    %117 = vector.broadcast %109 : vector<8x1xf32> to vector<8x32xf32>
    %118 = arith.subf %101, %117 : vector<8x32xf32>
    %cst_45 = arith.constant 9.99999974E-6 : f32
    %119 = vector.broadcast %cst_45 : f32 to vector<8x1xf32>
    %120 = arith.addf %116, %119 : vector<8x1xf32>
    %121 = math.rsqrt %120 : vector<8x1xf32>
    %122 = vector.broadcast %121 : vector<8x1xf32> to vector<8x32xf32>
    %123 = arith.mulf %118, %122 : vector<8x32xf32>
    %124 = vector.broadcast %103 : vector<1x32xf32> to vector<8x32xf32>
    %125 = arith.mulf %123, %124 : vector<8x32xf32>
    %126 = vector.broadcast %105 : vector<1x32xf32> to vector<8x32xf32>
    %127 = arith.addf %125, %126 : vector<8x32xf32>
    %128 = arith.addf %127, %7 : vector<8x32xf32>
    %129 = arith.truncf %128 : vector<8x32xf32> to vector<8x32xbf16>
    %c0_46 = arith.constant 0 : index
    %c0_47 = arith.constant 0 : index
    %c0_48 = arith.constant 0 : index
    %130 = vector.load %arg9[%c0_46, %c0_47, %c0_48] : memref<1x32x32xbf16, #tpu.memory_space<vmem>>, vector<1x32x32xbf16>
    %131 = vector.shape_cast %130 : vector<1x32x32xbf16> to vector<32x32xbf16>
    %cst_49 = arith.constant dense<0.000000e+00> : vector<8x32xf32>
    %132 = tpu.matmul %129, %131, %cst_49 {dimension_numbers = #tpu.dot_dimension_numbers<[1], [0], [0], [1], [0, 0, 1, 1], [], []>} : vector<8x32xbf16>, vector<32x32xbf16>, vector<8x32xf32> -> vector<8x32xf32>
    %c0_50 = arith.constant 0 : index
    %c0_51 = arith.constant 0 : index
    %c0_52 = arith.constant 0 : index
    %133 = vector.load %arg10[%c0_50, %c0_51, %c0_52] : memref<1x1x32xf32, #tpu.memory_space<vmem>>, vector<1x1x32xf32>
    %134 = vector.shape_cast %133 : vector<1x1x32xf32> to vector<1x32xf32>
    %135 = vector.broadcast %134 : vector<1x32xf32> to vector<8x32xf32>
    %136 = arith.addf %132, %135 : vector<8x32xf32>
    %c0_53 = arith.constant 0 : index
    %c0_54 = arith.constant 0 : index
    %c0_55 = arith.constant 0 : index
    %137 = vector.load %arg11[%c0_53, %c0_54, %c0_55] : memref<1x1x32xf32, #tpu.memory_space<vmem>>, vector<1x1x32xf32>
    %138 = vector.shape_cast %137 : vector<1x1x32xf32> to vector<1x32xf32>
    %c0_56 = arith.constant 0 : index
    %c0_57 = arith.constant 0 : index
    %c0_58 = arith.constant 0 : index
    %139 = vector.load %arg12[%c0_56, %c0_57, %c0_58] : memref<1x1x32xf32, #tpu.memory_space<vmem>>, vector<1x1x32xf32>
    %140 = vector.shape_cast %139 : vector<1x1x32xf32> to vector<1x32xf32>
    %cst_59 = arith.constant dense<0.000000e+00> : vector<8xf32>
    %141 = vector.multi_reduction <add>, %136, %cst_59 [1] : vector<8x32xf32> to vector<8xf32>
    %142 = vector.shape_cast %141 : vector<8xf32> to vector<8x1xf32>
    %cst_60 = arith.constant 3.200000e+01 : f32
    %143 = vector.broadcast %cst_60 : f32 to vector<8x1xf32>
    %144 = arith.divf %142, %143 : vector<8x1xf32>
    %145 = vector.broadcast %144 : vector<8x1xf32> to vector<8x32xf32>
    %146 = arith.subf %136, %145 : vector<8x32xf32>
    %147 = arith.mulf %146, %146 : vector<8x32xf32>
    %cst_61 = arith.constant dense<0.000000e+00> : vector<8xf32>
    %148 = vector.multi_reduction <add>, %147, %cst_61 [1] : vector<8x32xf32> to vector<8xf32>
    %149 = vector.shape_cast %148 : vector<8xf32> to vector<8x1xf32>
    %cst_62 = arith.constant 3.200000e+01 : f32
    %150 = vector.broadcast %cst_62 : f32 to vector<8x1xf32>
    %151 = arith.divf %149, %150 : vector<8x1xf32>
    %152 = vector.broadcast %144 : vector<8x1xf32> to vector<8x32xf32>
    %153 = arith.subf %136, %152 : vector<8x32xf32>
    %cst_63 = arith.constant 9.99999974E-6 : f32
    %154 = vector.broadcast %cst_63 : f32 to vector<8x1xf32>
    %155 = arith.addf %151, %154 : vector<8x1xf32>
    %156 = math.rsqrt %155 : vector<8x1xf32>
    %157 = vector.broadcast %156 : vector<8x1xf32> to vector<8x32xf32>
    %158 = arith.mulf %153, %157 : vector<8x32xf32>
    %159 = vector.broadcast %138 : vector<1x32xf32> to vector<8x32xf32>
    %160 = arith.mulf %158, %159 : vector<8x32xf32>
    %161 = vector.broadcast %140 : vector<1x32xf32> to vector<8x32xf32>
    %162 = arith.addf %160, %161 : vector<8x32xf32>
    %163 = arith.addf %162, %128 : vector<8x32xf32>
    %c0_64 = arith.constant 0 : index
    %c0_65 = arith.constant 0 : index
    %c0_66 = arith.constant 0 : index
    %164 = vector.load %arg13[%c0_64, %c0_65, %c0_66] : memref<1x8x32xf32, #tpu.memory_space<vmem>>, vector<1x8x32xf32>
    %165 = vector.shape_cast %164 : vector<1x8x32xf32> to vector<8x32xf32>
    %166 = vector.shape_cast %163 : vector<8x32xf32> to vector<1x8x32xf32>
    tpu.vector_store %arg13[%c0_64, %c0_65, %c0_66], %166 {strides = array<i32>} : memref<1x8x32xf32, #tpu.memory_space<vmem>>, vector<1x8x32xf32>,
    return
  }
  func.func @transform_0(%arg0: i32, %arg1: i32) -> (i32, i32, i32) {
    %c0_i32 = arith.constant 0 : i32
    %c0_i32_0 = arith.constant 0 : i32
    %c0_i32_1 = arith.constant 0 : i32
    return %arg0, %c0_i32, %c0_i32_0 : i32, i32, i32
  }
  func.func @transform_1(%arg0: i32, %arg1: i32) -> (i32, i32, i32) {
    %c0_i32 = arith.constant 0 : i32
    %c0_i32_0 = arith.constant 0 : i32
    %c0_i32_1 = arith.constant 0 : i32
    return %arg0, %c0_i32, %c0_i32_0 : i32, i32, i32
  }
  func.func @transform_2(%arg0: i32, %arg1: i32) -> (i32, i32, i32) {
    %c0_i32 = arith.constant 0 : i32
    %c0_i32_0 = arith.constant 0 : i32
    %c0_i32_1 = arith.constant 0 : i32
    return %arg0, %c0_i32, %c0_i32_0 : i32, i32, i32
  }
  func.func @transform_3(%arg0: i32, %arg1: i32) -> (i32, i32, i32) {
    %c0_i32 = arith.constant 0 : i32
    %c0_i32_0 = arith.constant 0 : i32
    %c0_i32_1 = arith.constant 0 : i32
    return %arg1, %c0_i32, %c0_i32_0 : i32, i32, i32
  }
  func.func @transform_4(%arg0: i32, %arg1: i32) -> (i32, i32, i32) {
    %c0_i32 = arith.constant 0 : i32
    %c0_i32_0 = arith.constant 0 : i32
    %c0_i32_1 = arith.constant 0 : i32
    return %arg1, %c0_i32, %c0_i32_0 : i32, i32, i32
  }
  func.func @transform_5(%arg0: i32, %arg1: i32) -> (i32, i32, i32) {
    %c0_i32 = arith.constant 0 : i32
    %c0_i32_0 = arith.constant 0 : i32
    %c0_i32_1 = arith.constant 0 : i32
    return %arg1, %c0_i32, %c0_i32_0 : i32, i32, i32
  }
  func.func @transform_6(%arg0: i32, %arg1: i32) -> (i32, i32, i32) {
    %c0_i32 = arith.constant 0 : i32
    %c0_i32_0 = arith.constant 0 : i32
    %c0_i32_1 = arith.constant 0 : i32
    return %arg1, %c0_i32, %c0_i32_0 : i32, i32, i32
  }
  func.func @transform_7(%arg0: i32, %arg1: i32) -> (i32, i32, i32) {
    %c0_i32 = arith.constant 0 : i32
    %c0_i32_0 = arith.constant 0 : i32
    %c0_i32_1 = arith.constant 0 : i32
    return %arg1, %c0_i32, %c0_i32_0 : i32, i32, i32
  }
  func.func @transform_8(%arg0: i32, %arg1: i32) -> (i32, i32, i32) {
    %c0_i32 = arith.constant 0 : i32
    %c0_i32_0 = arith.constant 0 : i32
    %c0_i32_1 = arith.constant 0 : i32
    return %arg1, %c0_i32, %c0_i32_0 : i32, i32, i32
  }
  func.func @transform_9(%arg0: i32, %arg1: i32) -> (i32, i32, i32) {
    %c0_i32 = arith.constant 0 : i32
    %c0_i32_0 = arith.constant 0 : i32
    %c0_i32_1 = arith.constant 0 : i32
    return %arg1, %c0_i32, %c0_i32_0 : i32, i32, i32
  }
  func.func @transform_10(%arg0: i32, %arg1: i32) -> (i32, i32, i32) {
    %c0_i32 = arith.constant 0 : i32
    %c0_i32_0 = arith.constant 0 : i32
    %c0_i32_1 = arith.constant 0 : i32
    return %arg1, %c0_i32, %c0_i32_0 : i32, i32, i32
  }
  func.func @transform_11(%arg0: i32, %arg1: i32) -> (i32, i32, i32) {
    %c0_i32 = arith.constant 0 : i32
    %c0_i32_0 = arith.constant 0 : i32
    %c0_i32_1 = arith.constant 0 : i32
    return %arg0, %c0_i32, %c0_i32_0 : i32, i32, i32
  }
}

</mosaic_0001>

<llo_original>
// kernel: tpu_custom_call.1
$region0: #{tpu_custom_call.1}
  #allocation0 [shape = 'u32[]', space=smem, size = 0x4, offset = 0x4, fixed_abs, tag = 'smem constant byte address 0x4 - core index']
  #allocation1 [shape = 'u32[144,128]{1,0:T(1,128)}', space=vmem, size = 0x12000, scoped, tag = 'internal scratch']
  %s0 = inlined_call_operand.hbm [shape: f32[2,8,32], index: 0, kind: input, shape index: {}]
  %s1 = inlined_call_operand.vmem [shape: f32[2,1,8], index: 1, kind: input, shape index: {}]
  %s2 = inlined_call_operand.hbm [shape: f32[2,8,32], index: 2, kind: input, shape index: {}]
  %s3 = inlined_call_operand.hbm [shape: bf16[2,32,96], index: 3, kind: input, shape index: {}]
  %s4 = inlined_call_operand.vmem [shape: f32[2,1,96], index: 4, kind: input, shape index: {}]
  %s5 = inlined_call_operand.vmem [shape: f32[2,1,32], index: 5, kind: input, shape index: {}]
  %s6 = inlined_call_operand.vmem [shape: f32[2,1,32], index: 6, kind: input, shape index: {}]
  %s7 = inlined_call_operand.hbm [shape: bf16[2,32,32], index: 7, kind: input, shape index: {}]
  %s8 = inlined_call_operand.vmem [shape: f32[2,1,32], index: 8, kind: input, shape index: {}]
  %s9 = inlined_call_operand.vmem [shape: f32[2,1,32], index: 9, kind: input, shape index: {}]
  %s10 = inlined_call_operand.vmem [shape: f32[2,1,32], index: 10, kind: input, shape index: {}]
  %s11 = inlined_call_operand.hbm [shape: f32[2,8,32], index: 11, kind: output, shape index: {}]
  %s12 = sld [smem:[#allocation0]]
  $region97: #{tpu_custom_call.1} parent=0
    _
  %s14 = ssub.s32 1, %s12
  %s15 = scalar_select 0, %s14, %s12
  $region1: #{tpu_custom_call.1} parent=0
    #allocation2 [shape = 'u8[8192]{0}', space=vmem, size = 0x2000, scoped, tag = 'input window, operand 0']
    #allocation3 [shape = 's32[2]{0}', space=sflag, size = 0x8, scoped, tag = 'scoped memory for tpu_custom_call.1']
    #allocation4 [shape = 's32[2]{0}', space=sflag, size = 0x8, scoped, tag = 'scoped memory for tpu_custom_call.1']
    #allocation5 [shape = 'u8[8192]{0}', space=vmem, size = 0x2000, scoped, tag = 'input window, operand 2']
    #allocation6 [shape = 's32[2]{0}', space=sflag, size = 0x8, scoped, tag = 'scoped memory for tpu_custom_call.1']
    #allocation7 [shape = 'u8[16384]{0}', space=vmem, size = 0x4000, scoped, tag = 'input window, operand 3']
    #allocation8 [shape = 'u8[16384]{0}', space=vmem, size = 0x4000, scoped, tag = 'input window, operand 7']
    #allocation9 [shape = 's32[2]{0}', space=sflag, size = 0x8, scoped, tag = 'scoped memory for tpu_custom_call.1']
    #allocation10 [shape = 'u8[8192]{0}', space=vmem, size = 0x2000, scoped, tag = 'output window, operand 0']
    %16 = vsyncpa [#allocation3], 0
    %s17 = scalar_lea.sflag [#allocation3], 1
    %18 = vsyncpa %s17, 0
    %19 = vsyncpa [#allocation6], 0
    %s20 = scalar_lea.sflag [#allocation6], 1
    %21 = vsyncpa %s20, 0
    %22 = vsyncpa [#allocation9], 0
    %s23 = scalar_lea.sflag [#allocation9], 1
    %24 = vsyncpa %s23, 0
    %25 = vsyncpa [#allocation4], 0
    %s26 = scalar_lea.sflag [#allocation4], 1
    %27 = vsyncpa %s26, 0
    loop: start=0, step=1, limit=6
    $region2: #{tpu_custom_call.1} parent=1 // loop_pre_header
      _
    $region3: #{tpu_custom_call.1} parent=1 // loop_header
      %s29 = sphi 0, %s33
      %p30 = scmp.ge.s32.totalorder %s29, 6
      %s36 = sphi 0, %s48
      %s37 = sphi 0, %s44
      %s38 = sphi 0, %s36
      %s39 = sphi 0, %s37
      %s40 = sphi 0, %s38
      %s41 = sphi 0, %s39
      %s51 = sphi 0, %s53
      %s54 = sphi 0, %s51
      %s55 = sphi 0, %s54
      %s71 = sphi 0, %s55
      %s77 = sphi 0, %s79
      %s80 = sphi 0, %s77
      %s81 = sphi 0, %s80
      %s97 = sphi 0, %s81
      %s103 = sphi 0, %s105
      %s106 = sphi 0, %s103
      %s107 = sphi 0, %s106
      %s123 = sphi 0, %s107
      %s129 = sphi 0, %s131
      %s132 = sphi 0, %s129
      %s133 = sphi 0, %s132
      %s149 = sphi 0, %s133
      %s155 = sphi 0, %s157
      %s158 = sphi 0, %s155
      %s159 = sphi 0, %s158
      %s175 = sphi 0, %s159
      %s181 = sphi 0, %s183
      %s184 = sphi 0, %s181
      %s185 = sphi 0, %s184
      %s201 = sphi 0, %s185
      %s207 = sphi 0, %s209
      %s210 = sphi 0, %s207
      %s211 = sphi 0, %s210
      %s227 = sphi 0, %s211
      %s233 = sphi 0, %s235
      %s236 = sphi 0, %s233
      %s237 = sphi 0, %s236
      %s253 = sphi 0, %s237
      %s259 = sphi 0, %s261
      %s262 = sphi 0, %s259
      %s263 = sphi 0, %s262
      %s279 = sphi 0, %s263
      %s285 = sphi 0, %s287
      %s288 = sphi 0, %s285
      %s289 = sphi 0, %s288
      %s305 = sphi 0, %s289
      %s311 = sphi 0, %s313
      %s314 = sphi 0, %s311
      %s315 = sphi 0, %s314
      %s331 = sphi 0, %s315
      %s337 = sphi 0, %s339
      %s340 = sphi 0, %s337
      %s341 = sphi 0, %s340
      %s357 = sphi 0, %s341
    $region4: #{tpu_custom_call.1} parent=1 // loop_header_branch
      %32 = sbr.rel (%p30) target = $region8
    $region5: #{tpu_custom_call.1} parent=1 // loop_body
      %s34 = ssub.s32 %s29, 1
      %s35 = ssub.s32 %s29, 2
      %s42 = sadd.s32 1, %s37
      %p43 = scmp.ge.s32.totalorder %s42, 2
      %s44 = scalar_select %p43, 0, %s42
      %s45 = sadd.s32 1, %s36
      %s46 = scalar_select %p43, %s45, %s36
      %p47 = scmp.ge.s32.totalorder %s46, 2
      %s48 = scalar_select %p47, 0, %s46
      %s49 = ssub.s32 %s36, %s48
      %p50 = scmp.eq.s32.totalorder %s49, 0
      %s52 = sadd.s32 %s51, 1
      %s53 = scalar_select %p50, %s51, %s52
      %p56 = pneg %p50
      %p57 = scmp.eq.s32.totalorder %s29, 3
      %p58 = por %p56, %p57
      %p59 = scmp.ne.s32.totalorder %s51, %s54
      %p60 = scmp.eq.s32.totalorder %s29, 0
      %p61 = por %p59, %p60
      %p62 = scmp.ne.s32.totalorder %s51, %s54
      %p63 = scmp.eq.s32.totalorder %s34, 3
      %p64 = por %p62, %p63
      %p65 = scmp.ne.s32.totalorder %s54, %s55
      %p66 = scmp.eq.s32.totalorder %s34, 0
      %p67 = por %p65, %p66
      %p68 = scmp.ne.s32.totalorder %s54, %s55
      %p69 = scmp.eq.s32.totalorder %s35, 3
      %p70 = por %p68, %p69
      %p72 = scmp.ne.s32.totalorder %s55, %s71
      %p73 = scmp.eq.s32.totalorder %s35, 0
      %p74 = por %p72, %p73
      %s75 = ssub.s32 %s36, %s48
      %p76 = scmp.eq.s32.totalorder %s75, 0
      %s78 = sadd.s32 %s77, 1
      %s79 = scalar_select %p76, %s77, %s78
      %p82 = pneg %p76
      %p83 = scmp.eq.s32.totalorder %s29, 3
      %p84 = por %p82, %p83
      %p85 = scmp.ne.s32.totalorder %s77, %s80
      %p86 = scmp.eq.s32.totalorder %s29, 0
      %p87 = por %p85, %p86
      %p88 = scmp.ne.s32.totalorder %s77, %s80
      %p89 = scmp.eq.s32.totalorder %s34, 3
      %p90 = por %p88, %p89
      %p91 = scmp.ne.s32.totalorder %s80, %s81
      %p92 = scmp.eq.s32.totalorder %s34, 0
      %p93 = por %p91, %p92
      %p94 = scmp.ne.s32.totalorder %s80, %s81
      %p95 = scmp.eq.s32.totalorder %s35, 3
      %p96 = por %p94, %p95
      %p98 = scmp.ne.s32.totalorder %s81, %s97
      %p99 = scmp.eq.s32.totalorder %s35, 0
      %p100 = por %p98, %p99
      %s101 = ssub.s32 %s36, %s48
      %p102 = scmp.eq.s32.totalorder %s101, 0
      %s104 = sadd.s32 %s103, 1
      %s105 = scalar_select %p102, %s103, %s104
      %p108 = pneg %p102
      %p109 = scmp.eq.s32.totalorder %s29, 3
      %p110 = por %p108, %p109
      %p111 = scmp.ne.s32.totalorder %s103, %s106
      %p112 = scmp.eq.s32.totalorder %s29, 0
      %p113 = por %p111, %p112
      %p114 = scmp.ne.s32.totalorder %s103, %s106
      %p115 = scmp.eq.s32.totalorder %s34, 3
      %p116 = por %p114, %p115
      %p117 = scmp.ne.s32.totalorder %s106, %s107
      %p118 = scmp.eq.s32.totalorder %s34, 0
      %p119 = por %p117, %p118
      %p120 = scmp.ne.s32.totalorder %s106, %s107
      %p121 = scmp.eq.s32.totalorder %s35, 3
      %p122 = por %p120, %p121
      %p124 = scmp.ne.s32.totalorder %s107, %s123
      %p125 = scmp.eq.s32.totalorder %s35, 0
      %p126 = por %p124, %p125
      %s127 = ssub.s32 %s37, %s44
      %p128 = scmp.eq.s32.totalorder %s127, 0
      %s130 = sadd.s32 %s129, 1
      %s131 = scalar_select %p128, %s129, %s130
      %p134 = pneg %p128
      %p135 = scmp.eq.s32.totalorder %s29, 3
      %p136 = por %p134, %p135
      %p137 = scmp.ne.s32.totalorder %s129, %s132
      %p138 = scmp.eq.s32.totalorder %s29, 0
      %p139 = por %p137, %p138
      %p140 = scmp.ne.s32.totalorder %s129, %s132
      %p141 = scmp.eq.s32.totalorder %s34, 3
      %p142 = por %p140, %p141
      %p143 = scmp.ne.s32.totalorder %s132, %s133
      %p144 = scmp.eq.s32.totalorder %s34, 0
      %p145 = por %p143, %p144
      %p146 = scmp.ne.s32.totalorder %s132, %s133
      %p147 = scmp.eq.s32.totalorder %s35, 3
      %p148 = por %p146, %p147
      %p150 = scmp.ne.s32.totalorder %s133, %s149
      %p151 = scmp.eq.s32.totalorder %s35, 0
      %p152 = por %p150, %p151
      %s153 = ssub.s32 %s37, %s44
      %p154 = scmp.eq.s32.totalorder %s153, 0
      %s156 = sadd.s32 %s155, 1
      %s157 = scalar_select %p154, %s155, %s156
      %p160 = pneg %p154
      %p161 = scmp.eq.s32.totalorder %s29, 3
      %p162 = por %p160, %p161
      %p163 = scmp.ne.s32.totalorder %s155, %s158
      %p164 = scmp.eq.s32.totalorder %s29, 0
      %p165 = por %p163, %p164
      %p166 = scmp.ne.s32.totalorder %s155, %s158
      %p167 = scmp.eq.s32.totalorder %s34, 3
      %p168 = por %p166, %p167
      %p169 = scmp.ne.s32.totalorder %s158, %s159
      %p170 = scmp.eq.s32.totalorder %s34, 0
      %p171 = por %p169, %p170
      %p172 = scmp.ne.s32.totalorder %s158, %s159
      %p173 = scmp.eq.s32.totalorder %s35, 3
      %p174 = por %p172, %p173
      %p176 = scmp.ne.s32.totalorder %s159, %s175
      %p177 = scmp.eq.s32.totalorder %s35, 0
      %p178 = por %p176, %p177
      %s179 = ssub.s32 %s37, %s44
      %p180 = scmp.eq.s32.totalorder %s179, 0
      %s182 = sadd.s32 %s181, 1
      %s183 = scalar_select %p180, %s181, %s182
      %p186 = pneg %p180
      %p187 = scmp.eq.s32.totalorder %s29, 3
      %p188 = por %p186, %p187
      %p189 = scmp.ne.s32.totalorder %s181, %s184
      %p190 = scmp.eq.s32.totalorder %s29, 0
      %p191 = por %p189, %p190
      %p192 = scmp.ne.s32.totalorder %s181, %s184
      %p193 = scmp.eq.s32.totalorder %s34, 3
      %p194 = por %p192, %p193
      %p195 = scmp.ne.s32.totalorder %s184, %s185
      %p196 = scmp.eq.s32.totalorder %s34, 0
      %p197 = por %p195, %p196
      %p198 = scmp.ne.s32.totalorder %s184, %s185
      %p199 = scmp.eq.s32.totalorder %s35, 3
      %p200 = por %p198, %p199
      %p202 = scmp.ne.s32.totalorder %s185, %s201
      %p203 = scmp.eq.s32.totalorder %s35, 0
      %p204 = por %p202, %p203
      %s205 = ssub.s32 %s37, %s44
      %p206 = scmp.eq.s32.totalorder %s205, 0
      %s208 = sadd.s32 %s207, 1
      %s209 = scalar_select %p206, %s207, %s208
      %p212 = pneg %p206
      %p213 = scmp.eq.s32.totalorder %s29, 3
      %p214 = por %p212, %p213
      %p215 = scmp.ne.s32.totalorder %s207, %s210
      %p216 = scmp.eq.s32.totalorder %s29, 0
      %p217 = por %p215, %p216
      %p218 = scmp.ne.s32.totalorder %s207, %s210
      %p219 = scmp.eq.s32.totalorder %s34, 3
      %p220 = por %p218, %p219
      %p221 = scmp.ne.s32.totalorder %s210, %s211
      %p222 = scmp.eq.s32.totalorder %s34, 0
      %p223 = por %p221, %p222
      %p224 = scmp.ne.s32.totalorder %s210, %s211
      %p225 = scmp.eq.s32.totalorder %s35, 3
      %p226 = por %p224, %p225
      %p228 = scmp.ne.s32.totalorder %s211, %s227
      %p229 = scmp.eq.s32.totalorder %s35, 0
      %p230 = por %p228, %p229
      %s231 = ssub.s32 %s37, %s44
      %p232 = scmp.eq.s32.totalorder %s231, 0
      %s234 = sadd.s32 %s233, 1
      %s235 = scalar_select %p232, %s233, %s234
      %p238 = pneg %p232
      %p239 = scmp.eq.s32.totalorder %s29, 3
      %p240 = por %p238, %p239
      %p241 = scmp.ne.s32.totalorder %s233, %s236
      %p242 = scmp.eq.s32.totalorder %s29, 0
      %p243 = por %p241, %p242
      %p244 = scmp.ne.s32.totalorder %s233, %s236
      %p245 = scmp.eq.s32.totalorder %s34, 3
      %p246 = por %p244, %p245
      %p247 = scmp.ne.s32.totalorder %s236, %s237
      %p248 = scmp.eq.s32.totalorder %s34, 0
      %p249 = por %p247, %p248
      %p250 = scmp.ne.s32.totalorder %s236, %s237
      %p251 = scmp.eq.s32.totalorder %s35, 3
      %p252 = por %p250, %p251
      %p254 = scmp.ne.s32.totalorder %s237, %s253
      %p255 = scmp.eq.s32.totalorder %s35, 0
      %p256 = por %p254, %p255
      %s257 = ssub.s32 %s37, %s44
      %p258 = scmp.eq.s32.totalorder %s257, 0
      %s260 = sadd.s32 %s259, 1
      %s261 = scalar_select %p258, %s259, %s260
      %p264 = pneg %p258
      %p265 = scmp.eq.s32.totalorder %s29, 3
      %p266 = por %p264, %p265
      %p267 = scmp.ne.s32.totalorder %s259, %s262
      %p268 = scmp.eq.s32.totalorder %s29, 0
      %p269 = por %p267, %p268
      %p270 = scmp.ne.s32.totalorder %s259, %s262
      %p271 = scmp.eq.s32.totalorder %s34, 3
      %p272 = por %p270, %p271
      %p273 = scmp.ne.s32.totalorder %s262, %s263
      %p274 = scmp.eq.s32.totalorder %s34, 0
      %p275 = por %p273, %p274
      %p276 = scmp.ne.s32.totalorder %s262, %s263
      %p277 = scmp.eq.s32.totalorder %s35, 3
      %p278 = por %p276, %p277
      %p280 = scmp.ne.s32.totalorder %s263, %s279
      %p281 = scmp.eq.s32.totalorder %s35, 0
      %p282 = por %p280, %p281
      %s283 = ssub.s32 %s37, %s44
      %p284 = scmp.eq.s32.totalorder %s283, 0
      %s286 = sadd.s32 %s285, 1
      %s287 = scalar_select %p284, %s285, %s286
      %p290 = pneg %p284
      %p291 = scmp.eq.s32.totalorder %s29, 3
      %p292 = por %p290, %p291
      %p293 = scmp.ne.s32.totalorder %s285, %s288
      %p294 = scmp.eq.s32.totalorder %s29, 0
      %p295 = por %p293, %p294
      %p296 = scmp.ne.s32.totalorder %s285, %s288
      %p297 = scmp.eq.s32.totalorder %s34, 3
      %p298 = por %p296, %p297
      %p299 = scmp.ne.s32.totalorder %s288, %s289
      %p300 = scmp.eq.s32.totalorder %s34, 0
      %p301 = por %p299, %p300
      %p302 = scmp.ne.s32.totalorder %s288, %s289
      %p303 = scmp.eq.s32.totalorder %s35, 3
      %p304 = por %p302, %p303
      %p306 = scmp.ne.s32.totalorder %s289, %s305
      %p307 = scmp.eq.s32.totalorder %s35, 0
      %p308 = por %p306, %p307
      %s309 = ssub.s32 %s37, %s44
      %p310 = scmp.eq.s32.totalorder %s309, 0
      %s312 = sadd.s32 %s311, 1
      %s313 = scalar_select %p310, %s311, %s312
      %p316 = pneg %p310
      %p317 = scmp.eq.s32.totalorder %s29, 3
      %p318 = por %p316, %p317
      %p319 = scmp.ne.s32.totalorder %s311, %s314
      %p320 = scmp.eq.s32.totalorder %s29, 0
      %p321 = por %p319, %p320
      %p322 = scmp.ne.s32.totalorder %s311, %s314
      %p323 = scmp.eq.s32.totalorder %s34, 3
      %p324 = por %p322, %p323
      %p325 = scmp.ne.s32.totalorder %s314, %s315
      %p326 = scmp.eq.s32.totalorder %s34, 0
      %p327 = por %p325, %p326
      %p328 = scmp.ne.s32.totalorder %s314, %s315
      %p329 = scmp.eq.s32.totalorder %s35, 3
      %p330 = por %p328, %p329
      %p332 = scmp.ne.s32.totalorder %s315, %s331
      %p333 = scmp.eq.s32.totalorder %s35, 0
      %p334 = por %p332, %p333
      %s335 = ssub.s32 %s36, %s48
      %p336 = scmp.eq.s32.totalorder %s335, 0
      %s338 = sadd.s32 %s337, 1
      %s339 = scalar_select %p336, %s337, %s338
      %p342 = pneg %p336
      %p343 = scmp.eq.s32.totalorder %s29, 3
      %p344 = por %p342, %p343
      %p345 = scmp.ne.s32.totalorder %s337, %s340
      %p346 = scmp.eq.s32.totalorder %s29, 0
      %p347 = por %p345, %p346
      %p348 = scmp.ne.s32.totalorder %s337, %s340
      %p349 = scmp.eq.s32.totalorder %s34, 3
      %p350 = por %p348, %p349
      %p351 = scmp.ne.s32.totalorder %s340, %s341
      %p352 = scmp.eq.s32.totalorder %s34, 0
      %p353 = por %p351, %p352
      %p354 = scmp.ne.s32.totalorder %s340, %s341
      %p355 = scmp.eq.s32.totalorder %s35, 3
      %p356 = por %p354, %p355
      %p358 = scmp.ne.s32.totalorder %s341, %s357
      %p359 = scmp.eq.s32.totalorder %s35, 0
      %p360 = por %p358, %p359
      %p361 = scmp.le.s32.totalorder 1, %s29
      %p362 = scmp.lt.s32.totalorder %s29, 5
      %p363 = pnand %p361, %p362
      %p364 = pneg %p363
      // Predicated region
      $region9: #{tpu_custom_call.1} parent=5 // pred_check
        _
      $region10: #{tpu_custom_call.1} parent=5 // pred_check_branch
        %366 = sbr.rel (%p363) target = $region12
      $region11: #{tpu_custom_call.1} parent=5 // pred_region
        %s367 = ssub.s32 %s29, 1
      $region12: #{tpu_custom_call.1} parent=5 // pred_fallthru
        _
      %p368 = scmp.lt.s32.totalorder %s29, 4
      // Predicated region
      $region13: #{tpu_custom_call.1} parent=5 // pred_check
        %p369 = pneg %p368
      $region14: #{tpu_custom_call.1} parent=5 // pred_check_branch
        %371 = sbr.rel (%p369) target = $region16
      $region15: #{tpu_custom_call.1} parent=5 // pred_region
        // Predicated region
        $region17: #{tpu_custom_call.1} parent=15 // pred_check
          %p372 = pneg %p61
        $region18: #{tpu_custom_call.1} parent=15 // pred_check_branch
          %374 = sbr.rel (%p372) target = $region20
        $region19: #{tpu_custom_call.1} parent=15 // pred_region
          %s375 = sand.u32 %s51, 1
          %s376 = scalar_lea.sflag [#allocation3], %s375
          %s377 = sand.u32 %s51, 1
          %s378 = smul.addr %s377, 8
          %s379 = scalar_lea.vmem [#allocation2], %s378
          %s381 = ssub.s32 128, 128
          %382 = vsyncadd %s376, %s381
          %s383 = smul.addr %s36, 128
          %s384 = scalar_lea.hbm %s0, %s383
          %s386 = sshll.u32 %s379, 4
          %s387 = int_to_ptr.vmem [resolvable:$true] %s386
          %389 = dma.hbm_to_vmem [thread:$0]  %s384, 128, %s387, %s376
        $region20: #{tpu_custom_call.1} parent=15 // pred_fallthru
          _
        // Predicated region
        $region21: #{tpu_custom_call.1} parent=15 // pred_check
          %p390 = pneg %p87
        $region22: #{tpu_custom_call.1} parent=15 // pred_check_branch
          %392 = sbr.rel (%p390) target = $region24
        $region23: #{tpu_custom_call.1} parent=15 // pred_region
          %p393 = scmp.lt.s32.totalorder %s36, 1
          %s394 = scalar_select %p393, %s36, 1
          %s395 = scalar_lea.vmem %s1, %s394
        $region24: #{tpu_custom_call.1} parent=15 // pred_fallthru
          _
        // Predicated region
        $region25: #{tpu_custom_call.1} parent=15 // pred_check
          %p396 = pneg %p113
        $region26: #{tpu_custom_call.1} parent=15 // pred_check_branch
          %398 = sbr.rel (%p396) target = $region28
        $region27: #{tpu_custom_call.1} parent=15 // pred_region
          %s399 = sand.u32 %s29, 1
          %s400 = scalar_lea.sflag [#allocation6], %s399
          %s401 = sand.u32 %s103, 1
          %s402 = smul.addr %s401, 8
          %s403 = scalar_lea.vmem [#allocation5], %s402
          %s405 = ssub.s32 128, 128
          %406 = vsyncadd %s400, %s405
          %s407 = smul.addr %s36, 128
          %s408 = scalar_lea.hbm %s2, %s407
          %s410 = sshll.u32 %s403, 4
          %s411 = int_to_ptr.vmem [resolvable:$true] %s410
          %413 = dma.hbm_to_vmem [thread:$0]  %s408, 128, %s411, %s400
        $region28: #{tpu_custom_call.1} parent=15 // pred_fallthru
          _
        // Predicated region
        $region29: #{tpu_custom_call.1} parent=15 // pred_check
          %p414 = pneg %p139
        $region30: #{tpu_custom_call.1} parent=15 // pred_check_branch
          %416 = sbr.rel (%p414) target = $region32
        $region31: #{tpu_custom_call.1} parent=15 // pred_region
          %s417 = sand.u32 %s29, 1
          %s418 = scalar_lea.sflag [#allocation6], %s417
          %s419 = sand.u32 %s129, 1
          %s420 = smul.addr %s419, 16
          %s421 = scalar_lea.vmem [#allocation7], %s420
          %s423 = ssub.s32 256, 256
          %424 = vsyncadd %s418, %s423
          %s425 = smul.addr %s37, 4
          %s426 = smul.addr %s425, 64
          %s427 = scalar_lea.hbm %s3, %s426
          %s428 = sshll.u32 %s421, 4
          %s429 = int_to_ptr.vmem [resolvable:$true] %s428
          %434 = dma.hbm_to_vmem [thread:$0]  %s427, 256, %s429, %s418, 64, 64, 4
        $region32: #{tpu_custom_call.1} parent=15 // pred_fallthru
          _
        // Predicated region
        $region33: #{tpu_custom_call.1} parent=15 // pred_check
          %p435 = pneg %p165
        $region34: #{tpu_custom_call.1} parent=15 // pred_check_branch
          %437 = sbr.rel (%p435) target = $region36
        $region35: #{tpu_custom_call.1} parent=15 // pred_region
          %p438 = scmp.lt.s32.totalorder %s37, 1
          %s439 = scalar_select %p438, %s37, 1
          %s440 = scalar_lea.vmem %s4, %s439
        $region36: #{tpu_custom_call.1} parent=15 // pred_fallthru
          _
        // Predicated region
        $region37: #{tpu_custom_call.1} parent=15 // pred_check
          %p441 = pneg %p191
        $region38: #{tpu_custom_call.1} parent=15 // pred_check_branch
          %443 = sbr.rel (%p441) target = $region40
        $region39: #{tpu_custom_call.1} parent=15 // pred_region
          %p444 = scmp.lt.s32.totalorder %s37, 1
          %s445 = scalar_select %p444, %s37, 1
          %s446 = scalar_lea.vmem %s5, %s445
        $region40: #{tpu_custom_call.1} parent=15 // pred_fallthru
          _
        // Predicated region
        $region41: #{tpu_custom_call.1} parent=15 // pred_check
          %p447 = pneg %p217
        $region42: #{tpu_custom_call.1} parent=15 // pred_check_branch
          %449 = sbr.rel (%p447) target = $region44
        $region43: #{tpu_custom_call.1} parent=15 // pred_region
          %p450 = scmp.lt.s32.totalorder %s37, 1
          %s451 = scalar_select %p450, %s37, 1
          %s452 = scalar_lea.vmem %s6, %s451
        $region44: #{tpu_custom_call.1} parent=15 // pred_fallthru
          _
        // Predicated region
        $region45: #{tpu_custom_call.1} parent=15 // pred_check
          %p453 = pneg %p243
        $region46: #{tpu_custom_call.1} parent=15 // pred_check_branch
          %455 = sbr.rel (%p453) target = $region48
        $region47: #{tpu_custom_call.1} parent=15 // pred_region
          %s456 = sand.u32 %s233, 1
          %s457 = scalar_lea.sflag [#allocation9], %s456
          %s458 = sand.u32 %s233, 1
          %s459 = smul.addr %s458, 16
          %s460 = scalar_lea.vmem [#allocation8], %s459
          %s462 = ssub.s32 256, 256
          %463 = vsyncadd %s457, %s462
          %s464 = smul.addr %s37, 4
          %s465 = smul.addr %s464, 64
          %s466 = scalar_lea.hbm %s7, %s465
          %s467 = sshll.u32 %s460, 4
          %s468 = int_to_ptr.vmem [resolvable:$true] %s467
          %473 = dma.hbm_to_vmem [thread:$0]  %s466, 256, %s468, %s457, 64, 64, 4
        $region48: #{tpu_custom_call.1} parent=15 // pred_fallthru
          _
        // Predicated region
        $region49: #{tpu_custom_call.1} parent=15 // pred_check
          %p474 = pneg %p269
        $region50: #{tpu_custom_call.1} parent=15 // pred_check_branch
          %476 = sbr.rel (%p474) target = $region52
        $region51: #{tpu_custom_call.1} parent=15 // pred_region
          %p477 = scmp.lt.s32.totalorder %s37, 1
          %s478 = scalar_select %p477, %s37, 1
          %s479 = scalar_lea.vmem %s8, %s478
        $region52: #{tpu_custom_call.1} parent=15 // pred_fallthru
          _
        // Predicated region
        $region53: #{tpu_custom_call.1} parent=15 // pred_check
          %p480 = pneg %p295
        $region54: #{tpu_custom_call.1} parent=15 // pred_check_branch
          %482 = sbr.rel (%p480) target = $region56
        $region55: #{tpu_custom_call.1} parent=15 // pred_region
          %p483 = scmp.lt.s32.totalorder %s37, 1
          %s484 = scalar_select %p483, %s37, 1
          %s485 = scalar_lea.vmem %s9, %s484
        $region56: #{tpu_custom_call.1} parent=15 // pred_fallthru
          _
        // Predicated region
        $region57: #{tpu_custom_call.1} parent=15 // pred_check
          %p486 = pneg %p321
        $region58: #{tpu_custom_call.1} parent=15 // pred_check_branch
          %488 = sbr.rel (%p486) target = $region60
        $region59: #{tpu_custom_call.1} parent=15 // pred_region
          %p489 = scmp.lt.s32.totalorder %s37, 1
          %s490 = scalar_select %p489, %s37, 1
          %s491 = scalar_lea.vmem %s10, %s490
        $region60: #{tpu_custom_call.1} parent=15 // pred_fallthru
          _
      $region16: #{tpu_custom_call.1} parent=5 // pred_fallthru
        _
      %p492 = scmp.le.s32.totalorder 1, %s29
      %p493 = scmp.lt.s32.totalorder %s29, 5
      %p494 = pnand %p492, %p493
      %p495 = pneg %p494
      // Predicated region
      $region61: #{tpu_custom_call.1} parent=5 // pred_check
        _
      $region62: #{tpu_custom_call.1} parent=5 // pred_check_branch
        %497 = sbr.rel (%p494) target = $region64
      $region63: #{tpu_custom_call.1} parent=5 // pred_region
        %s498 = ssub.s32 %s29, 1
        %s499 = sand.u32 %s54, 1
        %s500 = scalar_lea.sflag [#allocation3], %s499
        %s501 = sand.u32 %s54, 1
        %s502 = smul.addr %s501, 8
        %s503 = scalar_lea.vmem [#allocation2], %s502
        // Predicated region
        $region65: #{tpu_custom_call.1} parent=63 // pred_check
          %p504 = pneg %p67
        $region66: #{tpu_custom_call.1} parent=63 // pred_check_branch
          %506 = sbr.rel (%p504) target = $region68
        $region67: #{tpu_custom_call.1} parent=63 // pred_region
          %507 = dma.done %s500, 128
        $region68: #{tpu_custom_call.1} parent=63 // pred_fallthru
          _
        %s508 = sand.u32 %s34, 1
        %s509 = scalar_lea.sflag [#allocation6], %s508
        %s510 = sand.u32 %s106, 1
        %s511 = smul.addr %s510, 8
        %s512 = scalar_lea.vmem [#allocation5], %s511
        // Predicated region
        $region69: #{tpu_custom_call.1} parent=63 // pred_check
          %p513 = pneg %p119
        $region70: #{tpu_custom_call.1} parent=63 // pred_check_branch
          %515 = sbr.rel (%p513) target = $region72
        $region71: #{tpu_custom_call.1} parent=63 // pred_region
          %516 = dma.done %s509, 128
        $region72: #{tpu_custom_call.1} parent=63 // pred_fallthru
          _
        %s517 = sand.u32 %s34, 1
        %s518 = scalar_lea.sflag [#allocation6], %s517
        %s519 = sand.u32 %s132, 1
        %s520 = smul.addr %s519, 16
        %s521 = scalar_lea.vmem [#allocation7], %s520
        // Predicated region
        $region73: #{tpu_custom_call.1} parent=63 // pred_check
          %p522 = pneg %p145
        $region74: #{tpu_custom_call.1} parent=63 // pred_check_branch
          %524 = sbr.rel (%p522) target = $region76
        $region75: #{tpu_custom_call.1} parent=63 // pred_region
          %525 = dma.done %s518, 256
        $region76: #{tpu_custom_call.1} parent=63 // pred_fallthru
          _
        %s526 = sand.u32 %s236, 1
        %s527 = scalar_lea.sflag [#allocation9], %s526
        %s528 = sand.u32 %s236, 1
        %s529 = smul.addr %s528, 16
        %s530 = scalar_lea.vmem [#allocation8], %s529
        // Predicated region
        $region77: #{tpu_custom_call.1} parent=63 // pred_check
          %p531 = pneg %p249
        $region78: #{tpu_custom_call.1} parent=63 // pred_check_branch
          %533 = sbr.rel (%p531) target = $region80
        $region79: #{tpu_custom_call.1} parent=63 // pred_region
          %534 = dma.done %s527, 256
        $region80: #{tpu_custom_call.1} parent=63 // pred_fallthru
          _
        %s535 = sand.u32 %s54, 1
        %s536 = scalar_lea.sflag [#allocation3], %s535
        %s537 = sand.u32 %s54, 1
        %s538 = smul.addr %s537, 8
        %s539 = scalar_lea.vmem [#allocation2], %s538
        %p540 = pneg %p67
        %p541 = pneg %p64
        %p542 = scmp.lt.s32.totalorder %s38, 1
        %s543 = scalar_select %p542, %s38, 1
        %s544 = scalar_lea.vmem %s1, %s543
        %p545 = pneg %p93
        %p546 = pneg %p90
        %s547 = sand.u32 %s34, 1
        %s548 = scalar_lea.sflag [#allocation6], %s547
        %s549 = sand.u32 %s106, 1
        %s550 = smul.addr %s549, 8
        %s551 = scalar_lea.vmem [#allocation5], %s550
        %p552 = pneg %p119
        %p553 = pneg %p116
        %s554 = sand.u32 %s34, 1
        %s555 = scalar_lea.sflag [#allocation6], %s554
        %s556 = sand.u32 %s132, 1
        %s557 = smul.addr %s556, 16
        %s558 = scalar_lea.vmem [#allocation7], %s557
        %p559 = pneg %p145
        %p560 = pneg %p142
        %p561 = scmp.lt.s32.totalorder %s39, 1
        %s562 = scalar_select %p561, %s39, 1
        %s563 = scalar_lea.vmem %s4, %s562
        %p564 = pneg %p171
        %p565 = pneg %p168
        %p566 = scmp.lt.s32.totalorder %s39, 1
        %s567 = scalar_select %p566, %s39, 1
        %s568 = scalar_lea.vmem %s5, %s567
        %p569 = pneg %p197
        %p570 = pneg %p194
        %p571 = scmp.lt.s32.totalorder %s39, 1
        %s572 = scalar_select %p571, %s39, 1
        %s573 = scalar_lea.vmem %s6, %s572
        %p574 = pneg %p223
        %p575 = pneg %p220
        %s576 = sand.u32 %s236, 1
        %s577 = scalar_lea.sflag [#allocation9], %s576
        %s578 = sand.u32 %s236, 1
        %s579 = smul.addr %s578, 16
        %s580 = scalar_lea.vmem [#allocation8], %s579
        %p581 = pneg %p249
        %p582 = pneg %p246
        %p583 = scmp.lt.s32.totalorder %s39, 1
        %s584 = scalar_select %p583, %s39, 1
        %s585 = scalar_lea.vmem %s8, %s584
        %p586 = pneg %p275
        %p587 = pneg %p272
        %p588 = scmp.lt.s32.totalorder %s39, 1
        %s589 = scalar_select %p588, %s39, 1
        %s590 = scalar_lea.vmem %s9, %s589
        %p591 = pneg %p301
        %p592 = pneg %p298
        %p593 = scmp.lt.s32.totalorder %s39, 1
        %s594 = scalar_select %p593, %s39, 1
        %s595 = scalar_lea.vmem %s10, %s594
        %p596 = pneg %p327
        %p597 = pneg %p324
        %p598 = pneg %p353
        %p599 = pneg %p350
        %s600 = sand.u32 %s340, 1
        %s601 = scalar_lea.sflag [#allocation4], %s600
        %s602 = sand.u32 %s340, 1
        %s603 = smul.addr %s602, 8
        %s604 = scalar_lea.vmem [#allocation10], %s603
        %p605 = scmp.lt.s32.totalorder %s38, 1
        %s606 = scalar_select %p605, %s38, 1
        %s607 = scalar_lea.vmem %s1, %s606
        %p608 = scmp.lt.s32.totalorder %s39, 1
        %s609 = scalar_select %p608, %s39, 1
        %s610 = scalar_lea.vmem %s4, %s609
        %p611 = scmp.lt.s32.totalorder %s39, 1
        %s612 = scalar_select %p611, %s39, 1
        %s613 = scalar_lea.vmem %s5, %s612
        %p614 = scmp.lt.s32.totalorder %s39, 1
        %s615 = scalar_select %p614, %s39, 1
        %s616 = scalar_lea.vmem %s6, %s615
        %p617 = scmp.lt.s32.totalorder %s39, 1
        %s618 = scalar_select %p617, %s39, 1
        %s619 = scalar_lea.vmem %s8, %s618
        %p620 = scmp.lt.s32.totalorder %s39, 1
        %s621 = scalar_select %p620, %s39, 1
        %s622 = scalar_lea.vmem %s9, %s621
        %p623 = scmp.lt.s32.totalorder %s39, 1
        %s624 = scalar_select %p623, %s39, 1
        %s625 = scalar_lea.vmem %s10, %s624
        %p627 = scmp.eq.s32.totalorder %s39, 0
        // Predicated region
        $region81: #{tpu_custom_call.1} parent=63 // pred_check
          %p628 = pneg %p627
        $region82: #{tpu_custom_call.1} parent=63 // pred_check_branch
          %630 = sbr.rel (%p628) target = $region84
        $region83: #{tpu_custom_call.1} parent=63 // pred_region
          %v631 = vld [vmem:[%s503] sm:$0xff]
          %vm632 = vcmask 261120
          %633 = vst.msk [vmem:[%s604] sm:$0xff] %vm632, %v631
        $region84: #{tpu_custom_call.1} parent=63 // pred_fallthru
          _
        %v634 = vld [vmem:[%s604] sm:$0xff]
        %v635 = vld [vmem:[%s512] sm:$0xff]
        %v636 = vadd.f32 %v634, %v635
        %v637 = vpack.c.bf16 %v636, %v636
        %v638 = vld [vmem:[%s521] sm:$0xf]
        %v639 = vld [vmem:[%s521 + $0x4] sm:$0xf]
        %v640 = vld [vmem:[%s521 + $0x8] sm:$0xf]
        %v641 = vld [vmem:[%s521 + $0xc] sm:$0xf]
        %v642 = vld [vmem:[%s610] sm:$0x1]
        %v644 = vlaneseq
        %v645 = vshrl.u32 %v644, 7
        %v646 = vsub.s32 0, %v645
        %v647 = vrot.slane %v642, %v646
        %v653 = vunpack.c.l.b16 %v638
        %v654 = vunpack.c.l.b16 %v639
        %v655 = vunpack.c.l.b16 %v640
        %v656 = vunpack.c.l.b16 %v641
        %v657 = vpack.c.b16 %v654, %v653
        %v658 = vpack.c.b16 %v656, %v655
        %vm661 = vcmask 261120
        %v663 = vsel %vm661, %v637, 0
        %665 = vmatprep.subr.bf16.mxu0 0
        %666 = vmatpush1.bf16.msra.mxu0 %v657
        %667 = vmatprep.subr.bf16.mxu0 0
        %668 = vmatpush1.bf16.msra.mxu0 %v658
        %669 = vmatprep.subr.bf16.mxu0 0
        %670 = vmatpush1.bf16.msra.mxu0 0
        %671 = vmatprep.subr.bf16.mxu0 0
        %672 = vmatpush1.bf16.msra.mxu0 0
        %673 = vmatprep.subr.bf16.mxu0 0
        %674 = vmatpush1.bf16.msra.mxu0 0
        %675 = vmatprep.subr.bf16.mxu0 0
        %676 = vmatpush1.bf16.msra.mxu0 0
        %677 = vmatprep.subr.bf16.mxu0 0
        %678 = vmatpush1.bf16.msra.mxu0 0
        %679 = vmatprep.subr.bf16.mxu0 0
        %680 = vmatpush1.bf16.msra.mxu0 0
        %681 = vmatprep.subr.bf16.mxu0 0
        %682 = vmatpush1.bf16.msra.mxu0 0
        %683 = vmatprep.subr.bf16.mxu0 0
        %684 = vmatpush1.bf16.msra.mxu0 0
        %685 = vmatprep.subr.bf16.mxu0 0
        %686 = vmatpush1.bf16.msra.mxu0 0
        %687 = vmatprep.subr.bf16.mxu0 0
        %688 = vmatpush1.bf16.msra.mxu0 0
        %689 = vmatprep.subr.bf16.mxu0 0
        %690 = vmatpush1.bf16.msra.mxu0 0
        %691 = vmatprep.subr.bf16.mxu0 0
        %692 = vmatpush1.bf16.msra.mxu0 0
        %693 = vmatprep.subr.bf16.mxu0 0
        %694 = vmatpush1.bf16.msra.mxu0 0
        %695 = vmatprep.subr.bf16.mxu0 0
        %696 = vmatpush1.bf16.msra.mxu0 0
        %697 = vmatprep.mubr.bf16.mxu0 0
        %698 = vmatmul.mubr.bf16.gmra.mrb[0].mxu0 %v663
        %v699 = vpop.f32.mrb[0].mxu0
        %v700 = vadd.f32 %v647, %v699
        %v701 = vpop.f32.mrb[0].mxu0
        %v702 = vpop.f32.mrb[0].mxu0
        %v703 = vpop.f32.mrb[0].mxu0
        %704 = vdwg.mxu0
        %v705 = vpack.c.bf16 %v700, %v700
        %v706 = vld [vmem:[%s607] sm:$0x1]
        %v708 = vlaneseq
        %v709 = vshrl.u32 %v708, 7
        %v710 = vsub.s32 0, %v709
        %v711 = vrot.slane %v706, %v710
        %714 = vrot.lane.b32.xlu0 %v705, 96
        %v715 = vpop.permute.xlu0 %714
        %vm716 = vcmask 64512
        %v718 = vsel %vm716, %v705, 0
        %v721 = vsel %vm716, %v715, 0
        %723 = vmatprep.subr.bf16.mxu0 0
        %724 = vmatpush1.bf16.xpose.msra.mxu0 %v721
        %725 = vmatprep.subr.bf16.mxu0 0
        %726 = vmatpush1.bf16.xpose.msra.mxu0 0
        %727 = vmatprep.subr.bf16.mxu0 0
        %728 = vmatpush1.bf16.xpose.msra.mxu0 0
        %729 = vmatprep.subr.bf16.mxu0 0
        %730 = vmatpush1.bf16.xpose.msra.mxu0 0
        %731 = vmatprep.subr.bf16.mxu0 0
        %732 = vmatpush1.bf16.xpose.msra.mxu0 0
        %733 = vmatprep.subr.bf16.mxu0 0
        %734 = vmatpush1.bf16.xpose.msra.mxu0 0
        %735 = vmatprep.subr.bf16.mxu0 0
        %736 = vmatpush1.bf16.xpose.msra.mxu0 0
        %737 = vmatprep.subr.bf16.mxu0 0
        %738 = vmatpush1.bf16.xpose.msra.mxu0 0
        %739 = vmatprep.subr.bf16.mxu0 0
        %740 = vmatpush1.bf16.xpose.msra.mxu0 0
        %741 = vmatprep.subr.bf16.mxu0 0
        %742 = vmatpush1.bf16.xpose.msra.mxu0 0
        %743 = vmatprep.subr.bf16.mxu0 0
        %744 = vmatpush1.bf16.xpose.msra.mxu0 0
        %745 = vmatprep.subr.bf16.mxu0 0
        %746 = vmatpush1.bf16.xpose.msra.mxu0 0
        %747 = vmatprep.subr.bf16.mxu0 0
        %748 = vmatpush1.bf16.xpose.msra.mxu0 0
        %749 = vmatprep.subr.bf16.mxu0 0
        %750 = vmatpush1.bf16.xpose.msra.mxu0 0
        %751 = vmatprep.subr.bf16.mxu0 0
        %752 = vmatpush1.bf16.xpose.msra.mxu0 0
        %753 = vmatprep.subr.bf16.mxu0 0
        %754 = vmatpush1.bf16.xpose.msra.mxu0 0
        %755 = vmatprep.mubr.bf16.mxu0 0
        %756 = vmatmul.mubr.bf16.gmra.mrb[0].mxu0 %v718
        %v757 = vpop.f32.mrb[0].mxu0
        %v758 = vadd.f32 0.0, %v757
        %v759 = vpop.f32.mrb[0].mxu0
        %v760 = vpop.f32.mrb[0].mxu0
        %v761 = vpop.f32.mrb[0].mxu0
        %762 = vdwg.mxu0
        %v763 = vmul.f32 %v758, 0.35355338
        %v764 = vadd.f32 %v763, %v711
        %v765 = vsel %vm716, %v764, -inf
        %766 = vmax.xlane.f32.xlu0 %v765
        %v767 = vpop.xlane.xlu0 %766
        %v768 = vsub.f32 %v764, %v767
        %v769 = vmul.f32 %v768, 1.442695
        %v770 = vpow.pop %v769
        %v771 = vsel %vm716, %v770, 0.0
        %772 = vadd.xlane.f32.xlu0 %v771
        %v773 = vpop.xlane.xlu0 %772
        %v774 = vrcp.pop %v773
        %v775 = vmul.f32 %v770, %v774
        %v776 = vpack.c.bf16 %v775, %v775
        %777 = vrot.lane.b32.xlu0 %v705, 64
        %v778 = vpop.permute.xlu0 %777
        %v780 = vsel %vm716, %v776, 0
        %vm782 = vcmask 1043456
        %v784 = vsel %vm782, %v778, 0
        %786 = vmatprep.subr.bf16.mxu0 0
        %787 = vmatpush1.bf16.msra.mxu0 %v784
        %788 = vmatprep.subr.bf16.mxu0 0
        %789 = vmatpush1.bf16.msra.mxu0 0
        %790 = vmatprep.subr.bf16.mxu0 0
        %791 = vmatpush1.bf16.msra.mxu0 0
        %792 = vmatprep.subr.bf16.mxu0 0
        %793 = vmatpush1.bf16.msra.mxu0 0
        %794 = vmatprep.subr.bf16.mxu0 0
        %795 = vmatpush1.bf16.msra.mxu0 0
        %796 = vmatprep.subr.bf16.mxu0 0
        %797 = vmatpush1.bf16.msra.mxu0 0
        %798 = vmatprep.subr.bf16.mxu0 0
        %799 = vmatpush1.bf16.msra.mxu0 0
        %800 = vmatprep.subr.bf16.mxu0 0
        %801 = vmatpush1.bf16.msra.mxu0 0
        %802 = vmatprep.subr.bf16.mxu0 0
        %803 = vmatpush1.bf16.msra.mxu0 0
        %804 = vmatprep.subr.bf16.mxu0 0
        %805 = vmatpush1.bf16.msra.mxu0 0
        %806 = vmatprep.subr.bf16.mxu0 0
        %807 = vmatpush1.bf16.msra.mxu0 0
        %808 = vmatprep.subr.bf16.mxu0 0
        %809 = vmatpush1.bf16.msra.mxu0 0
        %810 = vmatprep.subr.bf16.mxu0 0
        %811 = vmatpush1.bf16.msra.mxu0 0
        %812 = vmatprep.subr.bf16.mxu0 0
        %813 = vmatpush1.bf16.msra.mxu0 0
        %814 = vmatprep.subr.bf16.mxu0 0
        %815 = vmatpush1.bf16.msra.mxu0 0
        %816 = vmatprep.subr.bf16.mxu0 0
        %817 = vmatpush1.bf16.msra.mxu0 0
        %818 = vmatprep.mubr.bf16.mxu0 0
        %819 = vmatmul.mubr.bf16.gmra.mrb[0].mxu0 %v780
        %v820 = vpop.f32.mrb[0].mxu0
        %v821 = vadd.f32 0.0, %v820
        %v822 = vpop.f32.mrb[0].mxu0
        %v823 = vpop.f32.mrb[0].mxu0
        %v824 = vpop.f32.mrb[0].mxu0
        %825 = vdwg.mxu0
        %826 = vrot.lane.b32.xlu0 %v705, 120
        %v827 = vpop.permute.xlu0 %826
        %828 = vrot.lane.b32.xlu0 %v705, 88
        %v829 = vpop.permute.xlu0 %828
        %v831 = vsel %vm716, %v827, 0
        %v834 = vsel %vm716, %v829, 0
        %836 = vmatprep.subr.bf16.mxu0 0
        %837 = vmatpush1.bf16.xpose.msra.mxu0 %v834
        %838 = vmatprep.subr.bf16.mxu0 0
        %839 = vmatpush1.bf16.xpose.msra.mxu0 0
        %840 = vmatprep.subr.bf16.mxu0 0
        %841 = vmatpush1.bf16.xpose.msra.mxu0 0
        %842 = vmatprep.subr.bf16.mxu0 0
        %843 = vmatpush1.bf16.xpose.msra.mxu0 0
        %844 = vmatprep.subr.bf16.mxu0 0
        %845 = vmatpush1.bf16.xpose.msra.mxu0 0
        %846 = vmatprep.subr.bf16.mxu0 0
        %847 = vmatpush1.bf16.xpose.msra.mxu0 0
        %848 = vmatprep.subr.bf16.mxu0 0
        %849 = vmatpush1.bf16.xpose.msra.mxu0 0
        %850 = vmatprep.subr.bf16.mxu0 0
        %851 = vmatpush1.bf16.xpose.msra.mxu0 0
        %852 = vmatprep.subr.bf16.mxu0 0
        %853 = vmatpush1.bf16.xpose.msra.mxu0 0
        %854 = vmatprep.subr.bf16.mxu0 0
        %855 = vmatpush1.bf16.xpose.msra.mxu0 0
        %856 = vmatprep.subr.bf16.mxu0 0
        %857 = vmatpush1.bf16.xpose.msra.mxu0 0
        %858 = vmatprep.subr.bf16.mxu0 0
        %859 = vmatpush1.bf16.xpose.msra.mxu0 0
        %860 = vmatprep.subr.bf16.mxu0 0
        %861 = vmatpush1.bf16.xpose.msra.mxu0 0
        %862 = vmatprep.subr.bf16.mxu0 0
        %863 = vmatpush1.bf16.xpose.msra.mxu0 0
        %864 = vmatprep.subr.bf16.mxu0 0
        %865 = vmatpush1.bf16.xpose.msra.mxu0 0
        %866 = vmatprep.subr.bf16.mxu0 0
        %867 = vmatpush1.bf16.xpose.msra.mxu0 0
        %868 = vmatprep.mubr.bf16.mxu0 0
        %869 = vmatmul.mubr.bf16.gmra.mrb[0].mxu0 %v831
        %v870 = vpop.f32.mrb[0].mxu0
        %v871 = vadd.f32 0.0, %v870
        %v872 = vpop.f32.mrb[0].mxu0
        %v873 = vpop.f32.mrb[0].mxu0
        %v874 = vpop.f32.mrb[0].mxu0
        %875 = vdwg.mxu0
        %v876 = vmul.f32 %v871, 0.35355338
        %v877 = vadd.f32 %v876, %v711
        %v878 = vsel %vm716, %v877, -inf
        %879 = vmax.xlane.f32.xlu0 %v878
        %v880 = vpop.xlane.xlu0 %879
        %v881 = vsub.f32 %v877, %v880
        %v882 = vmul.f32 %v881, 1.442695
        %v883 = vpow.pop %v882
        %v884 = vsel %vm716, %v883, 0.0
        %885 = vadd.xlane.f32.xlu0 %v884
        %v886 = vpop.xlane.xlu0 %885
        %v887 = vrcp.pop %v886
        %v888 = vmul.f32 %v883, %v887
        %v889 = vpack.c.bf16 %v888, %v888
        %890 = vrot.lane.b32.xlu0 %v705, 56
        %v891 = vpop.permute.xlu0 %890
        %v893 = vsel %vm716, %v889, 0
        %v896 = vsel %vm782, %v891, 0
        %898 = vmatprep.subr.bf16.mxu0 0
        %899 = vmatpush1.bf16.msra.mxu0 %v896
        %900 = vmatprep.subr.bf16.mxu0 0
        %901 = vmatpush1.bf16.msra.mxu0 0
        %902 = vmatprep.subr.bf16.mxu0 0
        %903 = vmatpush1.bf16.msra.mxu0 0
        %904 = vmatprep.subr.bf16.mxu0 0
        %905 = vmatpush1.bf16.msra.mxu0 0
        %906 = vmatprep.subr.bf16.mxu0 0
        %907 = vmatpush1.bf16.msra.mxu0 0
        %908 = vmatprep.subr.bf16.mxu0 0
        %909 = vmatpush1.bf16.msra.mxu0 0
        %910 = vmatprep.subr.bf16.mxu0 0
        %911 = vmatpush1.bf16.msra.mxu0 0
        %912 = vmatprep.subr.bf16.mxu0 0
        %913 = vmatpush1.bf16.msra.mxu0 0
        %914 = vmatprep.subr.bf16.mxu0 0
        %915 = vmatpush1.bf16.msra.mxu0 0
        %916 = vmatprep.subr.bf16.mxu0 0
        %917 = vmatpush1.bf16.msra.mxu0 0
        %918 = vmatprep.subr.bf16.mxu0 0
        %919 = vmatpush1.bf16.msra.mxu0 0
        %920 = vmatprep.subr.bf16.mxu0 0
        %921 = vmatpush1.bf16.msra.mxu0 0
        %922 = vmatprep.subr.bf16.mxu0 0
        %923 = vmatpush1.bf16.msra.mxu0 0
        %924 = vmatprep.subr.bf16.mxu0 0
        %925 = vmatpush1.bf16.msra.mxu0 0
        %926 = vmatprep.subr.bf16.mxu0 0
        %927 = vmatpush1.bf16.msra.mxu0 0
        %928 = vmatprep.subr.bf16.mxu0 0
        %929 = vmatpush1.bf16.msra.mxu0 0
        %930 = vmatprep.mubr.bf16.mxu0 0
        %931 = vmatmul.mubr.bf16.gmra.mrb[0].mxu0 %v893
        %v932 = vpop.f32.mrb[0].mxu0
        %v933 = vadd.f32 0.0, %v932
        %v934 = vpop.f32.mrb[0].mxu0
        %v935 = vpop.f32.mrb[0].mxu0
        %v936 = vpop.f32.mrb[0].mxu0
        %937 = vdwg.mxu0
        %938 = vrot.lane.b32.xlu0 %v705, 112
        %v939 = vpop.permute.xlu0 %938
        %940 = vrot.lane.b32.xlu0 %v705, 80
        %v941 = vpop.permute.xlu0 %940
        %v943 = vsel %vm716, %v939, 0
        %v946 = vsel %vm716, %v941, 0
        %948 = vmatprep.subr.bf16.mxu0 0
        %949 = vmatpush1.bf16.xpose.msra.mxu0 %v946
        %950 = vmatprep.subr.bf16.mxu0 0
        %951 = vmatpush1.bf16.xpose.msra.mxu0 0
        %952 = vmatprep.subr.bf16.mxu0 0
        %953 = vmatpush1.bf16.xpose.msra.mxu0 0
        %954 = vmatprep.subr.bf16.mxu0 0
        %955 = vmatpush1.bf16.xpose.msra.mxu0 0
        %956 = vmatprep.subr.bf16.mxu0 0
        %957 = vmatpush1.bf16.xpose.msra.mxu0 0
        %958 = vmatprep.subr.bf16.mxu0 0
        %959 = vmatpush1.bf16.xpose.msra.mxu0 0
        %960 = vmatprep.subr.bf16.mxu0 0
        %961 = vmatpush1.bf16.xpose.msra.mxu0 0
        %962 = vmatprep.subr.bf16.mxu0 0
        %963 = vmatpush1.bf16.xpose.msra.mxu0 0
        %964 = vmatprep.subr.bf16.mxu0 0
        %965 = vmatpush1.bf16.xpose.msra.mxu0 0
        %966 = vmatprep.subr.bf16.mxu0 0
        %967 = vmatpush1.bf16.xpose.msra.mxu0 0
        %968 = vmatprep.subr.bf16.mxu0 0
        %969 = vmatpush1.bf16.xpose.msra.mxu0 0
        %970 = vmatprep.subr.bf16.mxu0 0
        %971 = vmatpush1.bf16.xpose.msra.mxu0 0
        %972 = vmatprep.subr.bf16.mxu0 0
        %973 = vmatpush1.bf16.xpose.msra.mxu0 0
        %974 = vmatprep.subr.bf16.mxu0 0
        %975 = vmatpush1.bf16.xpose.msra.mxu0 0
        %976 = vmatprep.subr.bf16.mxu0 0
        %977 = vmatpush1.bf16.xpose.msra.mxu0 0
        %978 = vmatprep.subr.bf16.mxu0 0
        %979 = vmatpush1.bf16.xpose.msra.mxu0 0
        %980 = vmatprep.mubr.bf16.mxu0 0
        %981 = vmatmul.mubr.bf16.gmra.mrb[0].mxu0 %v943
        %v982 = vpop.f32.mrb[0].mxu0
        %v983 = vadd.f32 0.0, %v982
        %v984 = vpop.f32.mrb[0].mxu0
        %v985 = vpop.f32.mrb[0].mxu0
        %v986 = vpop.f32.mrb[0].mxu0
        %987 = vdwg.mxu0
        %v988 = vmul.f32 %v983, 0.35355338
        %v989 = vadd.f32 %v988, %v711
        %v990 = vsel %vm716, %v989, -inf
        %991 = vmax.xlane.f32.xlu0 %v990
        %v992 = vpop.xlane.xlu0 %991
        %v993 = vsub.f32 %v989, %v992
        %v994 = vmul.f32 %v993, 1.442695
        %v995 = vpow.pop %v994
        %v996 = vsel %vm716, %v995, 0.0
        %997 = vadd.xlane.f32.xlu0 %v996
        %v998 = vpop.xlane.xlu0 %997
        %v999 = vrcp.pop %v998
        %v1000 = vmul.f32 %v995, %v999
        %v1001 = vpack.c.bf16 %v1000, %v1000
        %1002 = vrot.lane.b32.xlu0 %v705, 48
        %v1003 = vpop.permute.xlu0 %1002
        %v1005 = vsel %vm716, %v1001, 0
        %v1008 = vsel %vm782, %v1003, 0
        %1010 = vmatprep.subr.bf16.mxu0 0
        %1011 = vmatpush1.bf16.msra.mxu0 %v1008
        %1012 = vmatprep.subr.bf16.mxu0 0
        %1013 = vmatpush1.bf16.msra.mxu0 0
        %1014 = vmatprep.subr.bf16.mxu0 0
        %1015 = vmatpush1.bf16.msra.mxu0 0
        %1016 = vmatprep.subr.bf16.mxu0 0
        %1017 = vmatpush1.bf16.msra.mxu0 0
        %1018 = vmatprep.subr.bf16.mxu0 0
        %1019 = vmatpush1.bf16.msra.mxu0 0
        %1020 = vmatprep.subr.bf16.mxu0 0
        %1021 = vmatpush1.bf16.msra.mxu0 0
        %1022 = vmatprep.subr.bf16.mxu0 0
        %1023 = vmatpush1.bf16.msra.mxu0 0
        %1024 = vmatprep.subr.bf16.mxu0 0
        %1025 = vmatpush1.bf16.msra.mxu0 0
        %1026 = vmatprep.subr.bf16.mxu0 0
        %1027 = vmatpush1.bf16.msra.mxu0 0
        %1028 = vmatprep.subr.bf16.mxu0 0
        %1029 = vmatpush1.bf16.msra.mxu0 0
        %1030 = vmatprep.subr.bf16.mxu0 0
        %1031 = vmatpush1.bf16.msra.mxu0 0
        %1032 = vmatprep.subr.bf16.mxu0 0
        %1033 = vmatpush1.bf16.msra.mxu0 0
        %1034 = vmatprep.subr.bf16.mxu0 0
        %1035 = vmatpush1.bf16.msra.mxu0 0
        %1036 = vmatprep.subr.bf16.mxu0 0
        %1037 = vmatpush1.bf16.msra.mxu0 0
        %1038 = vmatprep.subr.bf16.mxu0 0
        %1039 = vmatpush1.bf16.msra.mxu0 0
        %1040 = vmatprep.subr.bf16.mxu0 0
        %1041 = vmatpush1.bf16.msra.mxu0 0
        %1042 = vmatprep.mubr.bf16.mxu0 0
        %1043 = vmatmul.mubr.bf16.gmra.mrb[0].mxu0 %v1005
        %v1044 = vpop.f32.mrb[0].mxu0
        %v1045 = vadd.f32 0.0, %v1044
        %v1046 = vpop.f32.mrb[0].mxu0
        %v1047 = vpop.f32.mrb[0].mxu0
        %v1048 = vpop.f32.mrb[0].mxu0
        %1049 = vdwg.mxu0
        %1050 = vrot.lane.b32.xlu0 %v705, 104
        %v1051 = vpop.permute.xlu0 %1050
        %1052 = vrot.lane.b32.xlu0 %v705, 72
        %v1053 = vpop.permute.xlu0 %1052
        %v1055 = vsel %vm716, %v1051, 0
        %v1058 = vsel %vm716, %v1053, 0
        %1060 = vmatprep.subr.bf16.mxu0 0
        %1061 = vmatpush1.bf16.xpose.msra.mxu0 %v1058
        %1062 = vmatprep.subr.bf16.mxu0 0
        %1063 = vmatpush1.bf16.xpose.msra.mxu0 0
        %1064 = vmatprep.subr.bf16.mxu0 0
        %1065 = vmatpush1.bf16.xpose.msra.mxu0 0
        %1066 = vmatprep.subr.bf16.mxu0 0
        %1067 = vmatpush1.bf16.xpose.msra.mxu0 0
        %1068 = vmatprep.subr.bf16.mxu0 0
        %1069 = vmatpush1.bf16.xpose.msra.mxu0 0
        %1070 = vmatprep.subr.bf16.mxu0 0
        %1071 = vmatpush1.bf16.xpose.msra.mxu0 0
        %1072 = vmatprep.subr.bf16.mxu0 0
        %1073 = vmatpush1.bf16.xpose.msra.mxu0 0
        %1074 = vmatprep.subr.bf16.mxu0 0
        %1075 = vmatpush1.bf16.xpose.msra.mxu0 0
        %1076 = vmatprep.subr.bf16.mxu0 0
        %1077 = vmatpush1.bf16.xpose.msra.mxu0 0
        %1078 = vmatprep.subr.bf16.mxu0 0
        %1079 = vmatpush1.bf16.xpose.msra.mxu0 0
        %1080 = vmatprep.subr.bf16.mxu0 0
        %1081 = vmatpush1.bf16.xpose.msra.mxu0 0
        %1082 = vmatprep.subr.bf16.mxu0 0
        %1083 = vmatpush1.bf16.xpose.msra.mxu0 0
        %1084 = vmatprep.subr.bf16.mxu0 0
        %1085 = vmatpush1.bf16.xpose.msra.mxu0 0
        %1086 = vmatprep.subr.bf16.mxu0 0
        %1087 = vmatpush1.bf16.xpose.msra.mxu0 0
        %1088 = vmatprep.subr.bf16.mxu0 0
        %1089 = vmatpush1.bf16.xpose.msra.mxu0 0
        %1090 = vmatprep.subr.bf16.mxu0 0
        %1091 = vmatpush1.bf16.xpose.msra.mxu0 0
        %1092 = vmatprep.mubr.bf16.mxu0 0
        %1093 = vmatmul.mubr.bf16.gmra.mrb[0].mxu0 %v1055
        %v1094 = vpop.f32.mrb[0].mxu0
        %v1095 = vadd.f32 0.0, %v1094
        %v1096 = vpop.f32.mrb[0].mxu0
        %v1097 = vpop.f32.mrb[0].mxu0
        %v1098 = vpop.f32.mrb[0].mxu0
        %1099 = vdwg.mxu0
        %v1100 = vmul.f32 %v1095, 0.35355338
        %v1101 = vadd.f32 %v1100, %v711
        %v1102 = vsel %vm716, %v1101, -inf
        %1103 = vmax.xlane.f32.xlu0 %v1102
        %v1104 = vpop.xlane.xlu0 %1103
        %v1105 = vsub.f32 %v1101, %v1104
        %v1106 = vmul.f32 %v1105, 1.442695
        %v1107 = vpow.pop %v1106
        %v1108 = vsel %vm716, %v1107, 0.0
        %1109 = vadd.xlane.f32.xlu0 %v1108
        %v1110 = vpop.xlane.xlu0 %1109
        %v1111 = vrcp.pop %v1110
        %v1112 = vmul.f32 %v1107, %v1111
        %v1113 = vpack.c.bf16 %v1112, %v1112
        %1114 = vrot.lane.b32.xlu0 %v705, 40
        %v1115 = vpop.permute.xlu0 %1114
        %v1117 = vsel %vm716, %v1113, 0
        %v1120 = vsel %vm782, %v1115, 0
        %1122 = vmatprep.subr.bf16.mxu0 0
        %1123 = vmatpush1.bf16.msra.mxu0 %v1120
        %1124 = vmatprep.subr.bf16.mxu0 0
        %1125 = vmatpush1.bf16.msra.mxu0 0
        %1126 = vmatprep.subr.bf16.mxu0 0
        %1127 = vmatpush1.bf16.msra.mxu0 0
        %1128 = vmatprep.subr.bf16.mxu0 0
        %1129 = vmatpush1.bf16.msra.mxu0 0
        %1130 = vmatprep.subr.bf16.mxu0 0
        %1131 = vmatpush1.bf16.msra.mxu0 0
        %1132 = vmatprep.subr.bf16.mxu0 0
        %1133 = vmatpush1.bf16.msra.mxu0 0
        %1134 = vmatprep.subr.bf16.mxu0 0
        %1135 = vmatpush1.bf16.msra.mxu0 0
        %1136 = vmatprep.subr.bf16.mxu0 0
        %1137 = vmatpush1.bf16.msra.mxu0 0
        %1138 = vmatprep.subr.bf16.mxu0 0
        %1139 = vmatpush1.bf16.msra.mxu0 0
        %1140 = vmatprep.subr.bf16.mxu0 0
        %1141 = vmatpush1.bf16.msra.mxu0 0
        %1142 = vmatprep.subr.bf16.mxu0 0
        %1143 = vmatpush1.bf16.msra.mxu0 0
        %1144 = vmatprep.subr.bf16.mxu0 0
        %1145 = vmatpush1.bf16.msra.mxu0 0
        %1146 = vmatprep.subr.bf16.mxu0 0
        %1147 = vmatpush1.bf16.msra.mxu0 0
        %1148 = vmatprep.subr.bf16.mxu0 0
        %1149 = vmatpush1.bf16.msra.mxu0 0
        %1150 = vmatprep.subr.bf16.mxu0 0
        %1151 = vmatpush1.bf16.msra.mxu0 0
        %1152 = vmatprep.subr.bf16.mxu0 0
        %1153 = vmatpush1.bf16.msra.mxu0 0
        %1154 = vmatprep.mubr.bf16.mxu0 0
        %1155 = vmatmul.mubr.bf16.gmra.mrb[0].mxu0 %v1117
        %v1156 = vpop.f32.mrb[0].mxu0
        %v1157 = vadd.f32 0.0, %v1156
        %v1158 = vpop.f32.mrb[0].mxu0
        %v1159 = vpop.f32.mrb[0].mxu0
        %v1160 = vpop.f32.mrb[0].mxu0
        %1161 = vdwg.mxu0
        %1163 = vrot.lane.b32.xlu0 %v933, 8
        %v1164 = vpop.permute.xlu0 %1163
        %1167 = vrot.lane.b32.xlu0 %v1045, 16
        %v1168 = vpop.permute.xlu0 %1167
        %1171 = vrot.lane.b32.xlu0 %v1157, 24
        %v1172 = vpop.permute.xlu0 %1171
        %v1174 = vsel %vm716, %v821, %v1164
        %vm1175 = vcmask 130048
        %v1176 = vsel %vm1175, %v1174, %v1168
        %vm1177 = vcmask 195584
        %v1178 = vsel %vm1177, %v1176, %v1172
        %v1179 = vld [vmem:[%s613] sm:$0x1]
        %v1180 = vld [vmem:[%s616] sm:$0x1]
        %v1181 = vsel %vm661, %v1178, 0.0
        %1182 = vadd.xlane.f32.xlu0 %v1181
        %v1183 = vpop.xlane.xlu0 %1182
        %v1184 = vrcp.pop 32.0
        %v1185 = vmul.f32 %v1183, %v1184
        %v1186 = vsub.f32 %v1178, %v1185
        %v1187 = vmul.f32 %v1186, %v1186
        %v1188 = vsel %vm661, %v1187, 0.0
        %1189 = vadd.xlane.f32.xlu0 %v1188
        %v1190 = vpop.xlane.xlu0 %1189
        %v1191 = vmul.f32 %v1190, %v1184
        %v1192 = vadd.f32 %v1191, 1e-05
        %v1193 = vrsqrt.pop %v1192
        %v1194 = vmul.f32 %v1186, %v1193
        %v1196 = vlaneseq
        %v1197 = vshrl.u32 %v1196, 7
        %v1198 = vsub.s32 0, %v1197
        %v1199 = vrot.slane %v1179, %v1198
        %v1201 = vmul.f32 %v1194, %v1199
        %v1203 = vlaneseq
        %v1204 = vshrl.u32 %v1203, 7
        %v1205 = vsub.s32 0, %v1204
        %v1206 = vrot.slane %v1180, %v1205
        %v1208 = vadd.f32 %v1201, %v1206
        %v1209 = vadd.f32 %v1208, %v636
        %v1210 = vpack.c.bf16 %v1209, %v1209
        %v1211 = vld [vmem:[%s530] sm:$0xf]
        %v1212 = vld [vmem:[%s530 + $0x4] sm:$0xf]
        %v1213 = vld [vmem:[%s530 + $0x8] sm:$0xf]
        %v1214 = vld [vmem:[%s530 + $0xc] sm:$0xf]
        %v1215 = vld [vmem:[%s619] sm:$0x1]
        %v1217 = vlaneseq
        %v1218 = vshrl.u32 %v1217, 7
        %v1219 = vsub.s32 0, %v1218
        %v1220 = vrot.slane %v1215, %v1219
        %v1226 = vunpack.c.l.b16 %v1211
        %v1227 = vunpack.c.l.b16 %v1212
        %v1228 = vunpack.c.l.b16 %v1213
        %v1229 = vunpack.c.l.b16 %v1214
        %v1230 = vpack.c.b16 %v1227, %v1226
        %v1231 = vpack.c.b16 %v1229, %v1228
        %v1235 = vsel %vm661, %v1210, 0
        %1237 = vmatprep.subr.bf16.mxu0 0
        %1238 = vmatpush1.bf16.msra.mxu0 %v1230
        %1239 = vmatprep.subr.bf16.mxu0 0
        %1240 = vmatpush1.bf16.msra.mxu0 %v1231
        %1241 = vmatprep.subr.bf16.mxu0 0
        %1242 = vmatpush1.bf16.msra.mxu0 0
        %1243 = vmatprep.subr.bf16.mxu0 0
        %1244 = vmatpush1.bf16.msra.mxu0 0
        %1245 = vmatprep.subr.bf16.mxu0 0
        %1246 = vmatpush1.bf16.msra.mxu0 0
        %1247 = vmatprep.subr.bf16.mxu0 0
        %1248 = vmatpush1.bf16.msra.mxu0 0
        %1249 = vmatprep.subr.bf16.mxu0 0
        %1250 = vmatpush1.bf16.msra.mxu0 0
        %1251 = vmatprep.subr.bf16.mxu0 0
        %1252 = vmatpush1.bf16.msra.mxu0 0
        %1253 = vmatprep.subr.bf16.mxu0 0
        %1254 = vmatpush1.bf16.msra.mxu0 0
        %1255 = vmatprep.subr.bf16.mxu0 0
        %1256 = vmatpush1.bf16.msra.mxu0 0
        %1257 = vmatprep.subr.bf16.mxu0 0
        %1258 = vmatpush1.bf16.msra.mxu0 0
        %1259 = vmatprep.subr.bf16.mxu0 0
        %1260 = vmatpush1.bf16.msra.mxu0 0
        %1261 = vmatprep.subr.bf16.mxu0 0
        %1262 = vmatpush1.bf16.msra.mxu0 0
        %1263 = vmatprep.subr.bf16.mxu0 0
        %1264 = vmatpush1.bf16.msra.mxu0 0
        %1265 = vmatprep.subr.bf16.mxu0 0
        %1266 = vmatpush1.bf16.msra.mxu0 0
        %1267 = vmatprep.subr.bf16.mxu0 0
        %1268 = vmatpush1.bf16.msra.mxu0 0
        %1269 = vmatprep.mubr.bf16.mxu0 0
        %1270 = vmatmul.mubr.bf16.gmra.mrb[0].mxu0 %v1235
        %v1271 = vpop.f32.mrb[0].mxu0
        %v1272 = vadd.f32 %v1220, %v1271
        %v1273 = vpop.f32.mrb[0].mxu0
        %v1274 = vpop.f32.mrb[0].mxu0
        %v1275 = vpop.f32.mrb[0].mxu0
        %1276 = vdwg.mxu0
        %v1277 = vld [vmem:[%s622] sm:$0x1]
        %v1278 = vld [vmem:[%s625] sm:$0x1]
        %v1279 = vsel %vm661, %v1272, 0.0
        %1280 = vadd.xlane.f32.xlu0 %v1279
        %v1281 = vpop.xlane.xlu0 %1280
        %v1282 = vmul.f32 %v1281, %v1184
        %v1283 = vsub.f32 %v1272, %v1282
        %v1284 = vmul.f32 %v1283, %v1283
        %v1285 = vsel %vm661, %v1284, 0.0
        %1286 = vadd.xlane.f32.xlu0 %v1285
        %v1287 = vpop.xlane.xlu0 %1286
        %v1288 = vmul.f32 %v1287, %v1184
        %v1289 = vadd.f32 %v1288, 1e-05
        %v1290 = vrsqrt.pop %v1289
        %v1291 = vmul.f32 %v1283, %v1290
        %v1293 = vlaneseq
        %v1294 = vshrl.u32 %v1293, 7
        %v1295 = vsub.s32 0, %v1294
        %v1296 = vrot.slane %v1277, %v1295
        %v1298 = vmul.f32 %v1291, %v1296
        %v1300 = vlaneseq
        %v1301 = vshrl.u32 %v1300, 7
        %v1302 = vsub.s32 0, %v1301
        %v1303 = vrot.slane %v1278, %v1302
        %v1305 = vadd.f32 %v1298, %v1303
        %v1306 = vadd.f32 %v1305, %v1209
        %1307 = vst.msk [vmem:[%s604] sm:$0xff] %vm661, %v1306
        %s1308 = sand.u32 %s340, 1
        %s1309 = scalar_lea.sflag [#allocation4], %s1308
        %s1310 = sand.u32 %s340, 1
        %s1311 = smul.addr %s1310, 8
        %s1312 = scalar_lea.vmem [#allocation10], %s1311
        // Predicated region
        $region85: #{tpu_custom_call.1} parent=63 // pred_check
          %p1313 = pneg %p350
        $region86: #{tpu_custom_call.1} parent=63 // pred_check_branch
          %1315 = sbr.rel (%p1313) target = $region88
        $region87: #{tpu_custom_call.1} parent=63 // pred_region
          %s1317 = ssub.s32 128, 128
          %1318 = vsyncadd %s1309, %s1317
          %s1319 = smul.addr %s38, 128
          %s1320 = scalar_lea.hbm %s11, %s1319
          %s1322 = sshll.u32 %s1312, 4
          %s1323 = int_to_ptr.vmem [resolvable:$true] %s1322
          %1325 = dma.vmem_to_hbm [thread:$0]  %s1323, 128, %s1320, %s1309
        $region88: #{tpu_custom_call.1} parent=63 // pred_fallthru
          _
      $region64: #{tpu_custom_call.1} parent=5 // pred_fallthru
        _
      %p1326 = scmp.le.s32.totalorder 2, %s29
      // Predicated region
      $region89: #{tpu_custom_call.1} parent=5 // pred_check
        %p1327 = pneg %p1326
      $region90: #{tpu_custom_call.1} parent=5 // pred_check_branch
        %1329 = sbr.rel (%p1327) target = $region92
      $region91: #{tpu_custom_call.1} parent=5 // pred_region
        %s1330 = ssub.s32 %s29, 2
        // Predicated region
        $region93: #{tpu_custom_call.1} parent=91 // pred_check
          %p1331 = pneg %p356
        $region94: #{tpu_custom_call.1} parent=91 // pred_check_branch
          %1333 = sbr.rel (%p1331) target = $region96
        $region95: #{tpu_custom_call.1} parent=91 // pred_region
          %s1334 = sand.u32 %s341, 1
          %s1335 = scalar_lea.sflag [#allocation4], %s1334
          %s1336 = sand.u32 %s341, 1
          %s1337 = smul.addr %s1336, 8
          %s1338 = scalar_lea.vmem [#allocation10], %s1337
          %1339 = dma.done %s1335, 128
        $region96: #{tpu_custom_call.1} parent=91 // pred_fallthru
          _
      $region92: #{tpu_custom_call.1} parent=5 // pred_fallthru
        _
    $region6: #{tpu_custom_call.1} parent=1 // loop_footer
      %s33 = sadd.s32 1, %s29
    $region7: #{tpu_custom_call.1} parent=1 // loop_footer_branch
      %28 = sbr.rel target = $region3
    $region8: #{tpu_custom_call.1} parent=1 // loop_exit
      _
    %1340 = vsyncpa [#allocation3], 1
    %s1341 = scalar_lea.sflag [#allocation3], 1
    %1342 = vsyncpa %s1341, 1
    %1343 = vsyncpa [#allocation6], 1
    %s1344 = scalar_lea.sflag [#allocation6], 1
    %1345 = vsyncpa %s1344, 1
    %1346 = vsyncpa [#allocation9], 1
    %s1347 = scalar_lea.sflag [#allocation9], 1
    %1348 = vsyncpa %s1347, 1
    %1349 = vsyncpa [#allocation4], 1
    %s1350 = scalar_lea.sflag [#allocation4], 1
    %1351 = vsyncpa %s1350, 1

</llo_original>
